<compile_context>
chip_gen: v7x
topology: tpu7x:2x2x1
jax: 0.10.0
libtpu: 0.0.40
codegen_flags: <defaults>
</compile_context>

<pallas_src>
import functools

import jax
import jax.numpy as jnp
from jax.experimental import pallas as pl
from jax.experimental.pallas import tpu as pltpu


# -----------------------------------------------------------------------------
# Fused forward kernel factory.
# Gate order follows PyTorch nn.LSTM: i, f, g, o.  Bias is the combined
# (b_ih + b_hh), folded into the hoisted input projection.
# -----------------------------------------------------------------------------
def _make_forecaster_kernel(T, B, H, num_layers):

    def kernel(*refs):
        # refs = (x, [wih, whh, b] * num_layers, w_fc, b_fc, out)
        x_ref = refs[0]
        w_refs = refs[1:1 + 3 * num_layers]
        wfc_ref = refs[1 + 3 * num_layers]
        bfc_ref = refs[2 + 3 * num_layers]
        out_ref = refs[3 + 3 * num_layers]

        # Assemble the time-major (T*B, D) input in-kernel (row order t*B + b);
        # avoids a separate host/XLA transpose pass over x.
        inp = jnp.concatenate([x_ref[:, t, :] for t in range(T)], axis=0)

        h = None
        for layer in range(num_layers):
            wih_ref = w_refs[3 * layer + 0]
            whh_ref = w_refs[3 * layer + 1]
            b_ref = w_refs[3 * layer + 2]

            # Hoisted, time-parallel input projection (+ bias): one matmul with
            # M = T*B rows instead of T tiny matmuls inside the recurrence.
            gx = jnp.dot(inp, wih_ref[...],
                         preferred_element_type=jnp.float32) + b_ref[...]
            whh = whh_ref[...]          # load recurrent weights once per layer

            h = jnp.zeros((B, H), jnp.float32)
            c = jnp.zeros((B, H), jnp.float32)
            hs = []
            for t in range(T):          # fully unrolled sequential recurrence
                gates = gx[t * B:(t + 1) * B, :] + jnp.dot(
                    h, whh, preferred_element_type=jnp.float32)   # (B, 4H)
                i_g = jax.nn.sigmoid(gates[:, 0 * H:1 * H])
                f_g = jax.nn.sigmoid(gates[:, 1 * H:2 * H])
                g_g = jnp.tanh(gates[:, 2 * H:3 * H])
                o_g = jax.nn.sigmoid(gates[:, 3 * H:4 * H])
                c = f_g * c + i_g * g_g
                h = o_g * jnp.tanh(c)
                hs.append(h)

            if layer < num_layers - 1:
                # Inter-layer sequence stays in VMEM/vregs — never touches HBM.
                inp = jnp.concatenate(hs, axis=0)   # (T*B, H), time-major

        # out[:, -1, :] of the last layer == final h of the last layer.
        # TODO(synk): nn.Dropout is identity in eval/inference mode; no RNG mask.
        out = jnp.dot(h, wfc_ref[...],
                      preferred_element_type=jnp.float32) + bfc_ref[...]
        out_ref[...] = out.astype(out_ref.dtype)

    return kernel


# -----------------------------------------------------------------------------
# Public forward: single pallas_call, whole-array VMEM operands, no grid.
# -----------------------------------------------------------------------------
@jax.jit
def lstm_forecaster_forward(x, layer_params, w_fc, b_fc):
    # x: (B, T, D) batch-first, like PyTorch nn.LSTM(batch_first=True)
    B, T, D = x.shape
    H = layer_params[0][1].shape[0]
    O = w_fc.shape[1]
    num_layers = len(layer_params)

    flat_weights = []
    for (wih, whh, b) in layer_params:
        flat_weights += [wih, whh, b]

    n_inputs = 1 + len(flat_weights) + 2
    kernel = _make_forecaster_kernel(T, B, H, num_layers)

    return pl.pallas_call(
        kernel,
        out_shape=jax.ShapeDtypeStruct((B, O), jnp.float32),
        in_specs=[pl.BlockSpec(memory_space=pltpu.MemorySpace.VMEM)] * n_inputs,
        out_specs=pl.BlockSpec(memory_space=pltpu.MemorySpace.VMEM),
    )(x, *flat_weights, w_fc, b_fc)


# -----------------------------------------------------------------------------
# Pure-JAX reference (for correctness check)
# -----------------------------------------------------------------------------
def _lstm_layer_ref(x_tm, wih, whh, b):
    T, B, D = x_tm.shape
    H = whh.shape[0]

    def step(carry, x_t):
        h, c = carry
        gates = x_t @ wih + h @ whh + b
        i_g = jax.nn.sigmoid(gates[:, :H])
        f_g = jax.nn.sigmoid(gates[:, H:2 * H])
        g_g = jnp.tanh(gates[:, 2 * H:3 * H])
        o_g = jax.nn.sigmoid(gates[:, 3 * H:])
        c_new = f_g * c + i_g * g_g
        h_new = o_g * jnp.tanh(c_new)
        return (h_new, c_new), h_new

    init = (jnp.zeros((B, H), jnp.float32), jnp.zeros((B, H), jnp.float32))
    _, ys = jax.lax.scan(step, init, x_tm)
    return ys


def _forward_ref(x, layer_params, w_fc, b_fc):
    h_seq = jnp.transpose(x, (1, 0, 2))
    for (wih, whh, b) in layer_params:
        h_seq = _lstm_layer_ref(h_seq, wih, whh, b)
    return h_seq[-1] @ w_fc + b_fc


# -----------------------------------------------------------------------------
# Deterministic parameter construction (shapes follow torch.nn.LSTM / Linear)
# -----------------------------------------------------------------------------
def make_params(key, input_dim, hidden_dim, num_layers, output_dim):
    bound = 1.0 / jnp.sqrt(hidden_dim)
    params = []
    for layer in range(num_layers):
        in_dim = input_dim if layer == 0 else hidden_dim
        key, k1, k2, k3, k4 = jax.random.split(key, 5)
        # PyTorch stores weight_ih as (4H, in_dim); we keep the matmul-friendly
        # transposed layout (in_dim, 4H).
        wih = jax.random.uniform(k1, (in_dim, 4 * hidden_dim), jnp.float32,
                                 -bound, bound)
        whh = jax.random.uniform(k2, (hidden_dim, 4 * hidden_dim), jnp.float32,
                                 -bound, bound)
        b_ih = jax.random.uniform(k3, (4 * hidden_dim,), jnp.float32, -bound, bound)
        b_hh = jax.random.uniform(k4, (4 * hidden_dim,), jnp.float32, -bound, bound)
        params.append((wih, whh, (b_ih + b_hh).reshape(1, 4 * hidden_dim)))
    key, k5, k6 = jax.random.split(key, 3)
    w_fc = jax.random.uniform(k5, (hidden_dim, output_dim), jnp.float32, -bound, bound)
    b_fc = jax.random.uniform(k6, (1, output_dim), jnp.float32, -bound, bound)
    return params, w_fc, b_fc


if __name__ == "__main__":
    # Small shapes consistent with the module: batch=2, seq=8, input_dim=4,
    # hidden_dim=32, num_layers=2, output_dim=1.
    B, T, D = 2, 8, 4
    H, L, O = 32, 2, 1

    key = jax.random.PRNGKey(0)
    key, kx, kp = jax.random.split(key, 3)
    x = jax.random.normal(kx, (B, T, D), jnp.float32)
    layer_params, w_fc, b_fc = make_params(kp, D, H, L, O)

    out = lstm_forecaster_forward(x, tuple(layer_params), w_fc, b_fc)
    out = jax.block_until_ready(out)

    ref = _forward_ref(x, layer_params, w_fc, b_fc)
    assert out.shape == (B, O), out.shape
    assert jnp.allclose(out, ref, atol=1e-4, rtol=1e-4), (out, ref)

    print("KERNEL_OK")
</pallas_src>

<mosaic_0001>
module attributes {stable_mosaic.version = 11 : i64} {
  func.func @kernel(%arg0: memref<2x8x4xf32, #tpu.memory_space<vmem>>, %arg1: memref<4x128xf32, #tpu.memory_space<vmem>>, %arg2: memref<32x128xf32, #tpu.memory_space<vmem>>, %arg3: memref<1x128xf32, #tpu.memory_space<vmem>>, %arg4: memref<32x128xf32, #tpu.memory_space<vmem>>, %arg5: memref<32x128xf32, #tpu.memory_space<vmem>>, %arg6: memref<1x128xf32, #tpu.memory_space<vmem>>, %arg7: memref<32x1xf32, #tpu.memory_space<vmem>>, %arg8: memref<1x1xf32, #tpu.memory_space<vmem>>, %arg9: memref<2x1xf32, #tpu.memory_space<vmem>>) attributes {dimension_semantics = [], scalar_prefetch = 0 : i64, scratch_operands = 0 : i64, tpu.core_type = #tpu.core_type<tc>} {
    %c0 = arith.constant 0 : index
    %c0_0 = arith.constant 0 : index
    %c0_1 = arith.constant 0 : index
    %0 = vector.load %arg0[%c0, %c0_0, %c0_1] : memref<2x8x4xf32, #tpu.memory_space<vmem>>, vector<2x1x4xf32>
    %1 = vector.shape_cast %0 : vector<2x1x4xf32> to vector<2x4xf32>
    %c0_2 = arith.constant 0 : index
    %c1 = arith.constant 1 : index
    %c0_3 = arith.constant 0 : index
    %2 = vector.load %arg0[%c0_2, %c1, %c0_3] : memref<2x8x4xf32, #tpu.memory_space<vmem>>, vector<2x1x4xf32>
    %3 = vector.shape_cast %2 : vector<2x1x4xf32> to vector<2x4xf32>
    %c0_4 = arith.constant 0 : index
    %c2 = arith.constant 2 : index
    %c0_5 = arith.constant 0 : index
    %4 = vector.load %arg0[%c0_4, %c2, %c0_5] : memref<2x8x4xf32, #tpu.memory_space<vmem>>, vector<2x1x4xf32>
    %5 = vector.shape_cast %4 : vector<2x1x4xf32> to vector<2x4xf32>
    %c0_6 = arith.constant 0 : index
    %c3 = arith.constant 3 : index
    %c0_7 = arith.constant 0 : index
    %6 = vector.load %arg0[%c0_6, %c3, %c0_7] : memref<2x8x4xf32, #tpu.memory_space<vmem>>, vector<2x1x4xf32>
    %7 = vector.shape_cast %6 : vector<2x1x4xf32> to vector<2x4xf32>
    %c0_8 = arith.constant 0 : index
    %c4 = arith.constant 4 : index
    %c0_9 = arith.constant 0 : index
    %8 = vector.load %arg0[%c0_8, %c4, %c0_9] : memref<2x8x4xf32, #tpu.memory_space<vmem>>, vector<2x1x4xf32>
    %9 = vector.shape_cast %8 : vector<2x1x4xf32> to vector<2x4xf32>
    %c0_10 = arith.constant 0 : index
    %c5 = arith.constant 5 : index
    %c0_11 = arith.constant 0 : index
    %10 = vector.load %arg0[%c0_10, %c5, %c0_11] : memref<2x8x4xf32, #tpu.memory_space<vmem>>, vector<2x1x4xf32>
    %11 = vector.shape_cast %10 : vector<2x1x4xf32> to vector<2x4xf32>
    %c0_12 = arith.constant 0 : index
    %c6 = arith.constant 6 : index
    %c0_13 = arith.constant 0 : index
    %12 = vector.load %arg0[%c0_12, %c6, %c0_13] : memref<2x8x4xf32, #tpu.memory_space<vmem>>, vector<2x1x4xf32>
    %13 = vector.shape_cast %12 : vector<2x1x4xf32> to vector<2x4xf32>
    %c0_14 = arith.constant 0 : index
    %c7 = arith.constant 7 : index
    %c0_15 = arith.constant 0 : index
    %14 = vector.load %arg0[%c0_14, %c7, %c0_15] : memref<2x8x4xf32, #tpu.memory_space<vmem>>, vector<2x1x4xf32>
    %15 = vector.shape_cast %14 : vector<2x1x4xf32> to vector<2x4xf32>
    %16 = tpu.concatenate %1, %3, %5, %7, %9, %11, %13, %15 in 0 : vector<2x4xf32>, vector<2x4xf32>, vector<2x4xf32>, vector<2x4xf32>, vector<2x4xf32>, vector<2x4xf32>, vector<2x4xf32>, vector<2x4xf32> -> vector<16x4xf32>
    %c0_16 = arith.constant 0 : index
    %c0_17 = arith.constant 0 : index
    %17 = vector.load %arg1[%c0_16, %c0_17] : memref<4x128xf32, #tpu.memory_space<vmem>>, vector<4x128xf32>
    %cst = arith.constant dense<0.000000e+00> : vector<16x128xf32>
    %18 = tpu.matmul %16, %17, %cst {dimension_numbers = #tpu.dot_dimension_numbers<[1], [0], [0], [1], [0, 0, 1, 1], [], []>} : vector<16x4xf32>, vector<4x128xf32>, vector<16x128xf32> -> vector<16x128xf32>
    %c0_18 = arith.constant 0 : index
    %c0_19 = arith.constant 0 : index
    %19 = vector.load %arg3[%c0_18, %c0_19] : memref<1x128xf32, #tpu.memory_space<vmem>>, vector<1x128xf32>
    %20 = vector.broadcast %19 : vector<1x128xf32> to vector<16x128xf32>
    %21 = arith.addf %18, %20 : vector<16x128xf32>
    %c0_20 = arith.constant 0 : index
    %c0_21 = arith.constant 0 : index
    %22 = vector.load %arg2[%c0_20, %c0_21] : memref<32x128xf32, #tpu.memory_space<vmem>>, vector<32x128xf32>
    %cst_22 = arith.constant 0.000000e+00 : f32
    %23 = vector.broadcast %cst_22 : f32 to vector<2x32xf32>
    %cst_23 = arith.constant 0.000000e+00 : f32
    %24 = vector.broadcast %cst_23 : f32 to vector<2x32xf32>
    %25 = vector.extract_strided_slice %21 {offsets = [0, 0], sizes = [2, 128], strides = [1, 1]} : vector<16x128xf32> to vector<2x128xf32>
    %cst_24 = arith.constant dense<0.000000e+00> : vector<2x128xf32>
    %26 = tpu.matmul %23, %22, %cst_24 {dimension_numbers = #tpu.dot_dimension_numbers<[1], [0], [0], [1], [0, 0, 1, 1], [], []>} : vector<2x32xf32>, vector<32x128xf32>, vector<2x128xf32> -> vector<2x128xf32>
    %27 = arith.addf %25, %26 : vector<2x128xf32>
    %28 = vector.extract_strided_slice %27 {offsets = [0, 0], sizes = [2, 32], strides = [1, 1]} : vector<2x128xf32> to vector<2x32xf32>
    %29 = arith.negf %28 : vector<2x32xf32>
    %30 = math.exp %29 : vector<2x32xf32>
    %cst_25 = arith.constant 1.000000e+00 : f32
    %31 = vector.broadcast %cst_25 : f32 to vector<2x32xf32>
    %32 = arith.addf %31, %30 : vector<2x32xf32>
    %33 = arith.divf %31, %32 : vector<2x32xf32>
    %34 = vector.extract_strided_slice %27 {offsets = [0, 32], sizes = [2, 32], strides = [1, 1]} : vector<2x128xf32> to vector<2x32xf32>
    %35 = arith.negf %34 : vector<2x32xf32>
    %36 = math.exp %35 : vector<2x32xf32>
    %cst_26 = arith.constant 1.000000e+00 : f32
    %37 = vector.broadcast %cst_26 : f32 to vector<2x32xf32>
    %38 = arith.addf %37, %36 : vector<2x32xf32>
    %39 = arith.divf %37, %38 : vector<2x32xf32>
    %40 = vector.extract_strided_slice %27 {offsets = [0, 64], sizes = [2, 32], strides = [1, 1]} : vector<2x128xf32> to vector<2x32xf32>
    %41 = math.tanh %40 : vector<2x32xf32>
    %42 = vector.extract_strided_slice %27 {offsets = [0, 96], sizes = [2, 32], strides = [1, 1]} : vector<2x128xf32> to vector<2x32xf32>
    %43 = arith.negf %42 : vector<2x32xf32>
    %44 = math.exp %43 : vector<2x32xf32>
    %cst_27 = arith.constant 1.000000e+00 : f32
    %45 = vector.broadcast %cst_27 : f32 to vector<2x32xf32>
    %46 = arith.addf %45, %44 : vector<2x32xf32>
    %47 = arith.divf %45, %46 : vector<2x32xf32>
    %48 = arith.mulf %39, %24 : vector<2x32xf32>
    %49 = arith.mulf %33, %41 : vector<2x32xf32>
    %50 = arith.addf %48, %49 : vector<2x32xf32>
    %51 = math.tanh %50 : vector<2x32xf32>
    %52 = arith.mulf %47, %51 : vector<2x32xf32>
    %53 = vector.extract_strided_slice %21 {offsets = [2, 0], sizes = [2, 128], strides = [1, 1]} : vector<16x128xf32> to vector<2x128xf32>
    %cst_28 = arith.constant dense<0.000000e+00> : vector<2x128xf32>
    %54 = tpu.matmul %52, %22, %cst_28 {dimension_numbers = #tpu.dot_dimension_numbers<[1], [0], [0], [1], [0, 0, 1, 1], [], []>} : vector<2x32xf32>, vector<32x128xf32>, vector<2x128xf32> -> vector<2x128xf32>
    %55 = arith.addf %53, %54 : vector<2x128xf32>
    %56 = vector.extract_strided_slice %55 {offsets = [0, 0], sizes = [2, 32], strides = [1, 1]} : vector<2x128xf32> to vector<2x32xf32>
    %57 = arith.negf %56 : vector<2x32xf32>
    %58 = math.exp %57 : vector<2x32xf32>
    %cst_29 = arith.constant 1.000000e+00 : f32
    %59 = vector.broadcast %cst_29 : f32 to vector<2x32xf32>
    %60 = arith.addf %59, %58 : vector<2x32xf32>
    %61 = arith.divf %59, %60 : vector<2x32xf32>
    %62 = vector.extract_strided_slice %55 {offsets = [0, 32], sizes = [2, 32], strides = [1, 1]} : vector<2x128xf32> to vector<2x32xf32>
    %63 = arith.negf %62 : vector<2x32xf32>
    %64 = math.exp %63 : vector<2x32xf32>
    %cst_30 = arith.constant 1.000000e+00 : f32
    %65 = vector.broadcast %cst_30 : f32 to vector<2x32xf32>
    %66 = arith.addf %65, %64 : vector<2x32xf32>
    %67 = arith.divf %65, %66 : vector<2x32xf32>
    %68 = vector.extract_strided_slice %55 {offsets = [0, 64], sizes = [2, 32], strides = [1, 1]} : vector<2x128xf32> to vector<2x32xf32>
    %69 = math.tanh %68 : vector<2x32xf32>
    %70 = vector.extract_strided_slice %55 {offsets = [0, 96], sizes = [2, 32], strides = [1, 1]} : vector<2x128xf32> to vector<2x32xf32>
    %71 = arith.negf %70 : vector<2x32xf32>
    %72 = math.exp %71 : vector<2x32xf32>
    %cst_31 = arith.constant 1.000000e+00 : f32
    %73 = vector.broadcast %cst_31 : f32 to vector<2x32xf32>
    %74 = arith.addf %73, %72 : vector<2x32xf32>
    %75 = arith.divf %73, %74 : vector<2x32xf32>
    %76 = arith.mulf %67, %50 : vector<2x32xf32>
    %77 = arith.mulf %61, %69 : vector<2x32xf32>
    %78 = arith.addf %76, %77 : vector<2x32xf32>
    %79 = math.tanh %78 : vector<2x32xf32>
    %80 = arith.mulf %75, %79 : vector<2x32xf32>
    %81 = vector.extract_strided_slice %21 {offsets = [4, 0], sizes = [2, 128], strides = [1, 1]} : vector<16x128xf32> to vector<2x128xf32>
    %cst_32 = arith.constant dense<0.000000e+00> : vector<2x128xf32>
    %82 = tpu.matmul %80, %22, %cst_32 {dimension_numbers = #tpu.dot_dimension_numbers<[1], [0], [0], [1], [0, 0, 1, 1], [], []>} : vector<2x32xf32>, vector<32x128xf32>, vector<2x128xf32> -> vector<2x128xf32>
    %83 = arith.addf %81, %82 : vector<2x128xf32>
    %84 = vector.extract_strided_slice %83 {offsets = [0, 0], sizes = [2, 32], strides = [1, 1]} : vector<2x128xf32> to vector<2x32xf32>
    %85 = arith.negf %84 : vector<2x32xf32>
    %86 = math.exp %85 : vector<2x32xf32>
    %cst_33 = arith.constant 1.000000e+00 : f32
    %87 = vector.broadcast %cst_33 : f32 to vector<2x32xf32>
    %88 = arith.addf %87, %86 : vector<2x32xf32>
    %89 = arith.divf %87, %88 : vector<2x32xf32>
    %90 = vector.extract_strided_slice %83 {offsets = [0, 32], sizes = [2, 32], strides = [1, 1]} : vector<2x128xf32> to vector<2x32xf32>
    %91 = arith.negf %90 : vector<2x32xf32>
    %92 = math.exp %91 : vector<2x32xf32>
    %cst_34 = arith.constant 1.000000e+00 : f32
    %93 = vector.broadcast %cst_34 : f32 to vector<2x32xf32>
    %94 = arith.addf %93, %92 : vector<2x32xf32>
    %95 = arith.divf %93, %94 : vector<2x32xf32>
    %96 = vector.extract_strided_slice %83 {offsets = [0, 64], sizes = [2, 32], strides = [1, 1]} : vector<2x128xf32> to vector<2x32xf32>
    %97 = math.tanh %96 : vector<2x32xf32>
    %98 = vector.extract_strided_slice %83 {offsets = [0, 96], sizes = [2, 32], strides = [1, 1]} : vector<2x128xf32> to vector<2x32xf32>
    %99 = arith.negf %98 : vector<2x32xf32>
    %100 = math.exp %99 : vector<2x32xf32>
    %cst_35 = arith.constant 1.000000e+00 : f32
    %101 = vector.broadcast %cst_35 : f32 to vector<2x32xf32>
    %102 = arith.addf %101, %100 : vector<2x32xf32>
    %103 = arith.divf %101, %102 : vector<2x32xf32>
    %104 = arith.mulf %95, %78 : vector<2x32xf32>
    %105 = arith.mulf %89, %97 : vector<2x32xf32>
    %106 = arith.addf %104, %105 : vector<2x32xf32>
    %107 = math.tanh %106 : vector<2x32xf32>
    %108 = arith.mulf %103, %107 : vector<2x32xf32>
    %109 = vector.extract_strided_slice %21 {offsets = [6, 0], sizes = [2, 128], strides = [1, 1]} : vector<16x128xf32> to vector<2x128xf32>
    %cst_36 = arith.constant dense<0.000000e+00> : vector<2x128xf32>
    %110 = tpu.matmul %108, %22, %cst_36 {dimension_numbers = #tpu.dot_dimension_numbers<[1], [0], [0], [1], [0, 0, 1, 1], [], []>} : vector<2x32xf32>, vector<32x128xf32>, vector<2x128xf32> -> vector<2x128xf32>
    %111 = arith.addf %109, %110 : vector<2x128xf32>
    %112 = vector.extract_strided_slice %111 {offsets = [0, 0], sizes = [2, 32], strides = [1, 1]} : vector<2x128xf32> to vector<2x32xf32>
    %113 = arith.negf %112 : vector<2x32xf32>
    %114 = math.exp %113 : vector<2x32xf32>
    %cst_37 = arith.constant 1.000000e+00 : f32
    %115 = vector.broadcast %cst_37 : f32 to vector<2x32xf32>
    %116 = arith.addf %115, %114 : vector<2x32xf32>
    %117 = arith.divf %115, %116 : vector<2x32xf32>
    %118 = vector.extract_strided_slice %111 {offsets = [0, 32], sizes = [2, 32], strides = [1, 1]} : vector<2x128xf32> to vector<2x32xf32>
    %119 = arith.negf %118 : vector<2x32xf32>
    %120 = math.exp %119 : vector<2x32xf32>
    %cst_38 = arith.constant 1.000000e+00 : f32
    %121 = vector.broadcast %cst_38 : f32 to vector<2x32xf32>
    %122 = arith.addf %121, %120 : vector<2x32xf32>
    %123 = arith.divf %121, %122 : vector<2x32xf32>
    %124 = vector.extract_strided_slice %111 {offsets = [0, 64], sizes = [2, 32], strides = [1, 1]} : vector<2x128xf32> to vector<2x32xf32>
    %125 = math.tanh %124 : vector<2x32xf32>
    %126 = vector.extract_strided_slice %111 {offsets = [0, 96], sizes = [2, 32], strides = [1, 1]} : vector<2x128xf32> to vector<2x32xf32>
    %127 = arith.negf %126 : vector<2x32xf32>
    %128 = math.exp %127 : vector<2x32xf32>
    %cst_39 = arith.constant 1.000000e+00 : f32
    %129 = vector.broadcast %cst_39 : f32 to vector<2x32xf32>
    %130 = arith.addf %129, %128 : vector<2x32xf32>
    %131 = arith.divf %129, %130 : vector<2x32xf32>
    %132 = arith.mulf %123, %106 : vector<2x32xf32>
    %133 = arith.mulf %117, %125 : vector<2x32xf32>
    %134 = arith.addf %132, %133 : vector<2x32xf32>
    %135 = math.tanh %134 : vector<2x32xf32>
    %136 = arith.mulf %131, %135 : vector<2x32xf32>
    %137 = vector.extract_strided_slice %21 {offsets = [8, 0], sizes = [2, 128], strides = [1, 1]} : vector<16x128xf32> to vector<2x128xf32>
    %cst_40 = arith.constant dense<0.000000e+00> : vector<2x128xf32>
    %138 = tpu.matmul %136, %22, %cst_40 {dimension_numbers = #tpu.dot_dimension_numbers<[1], [0], [0], [1], [0, 0, 1, 1], [], []>} : vector<2x32xf32>, vector<32x128xf32>, vector<2x128xf32> -> vector<2x128xf32>
    %139 = arith.addf %137, %138 : vector<2x128xf32>
    %140 = vector.extract_strided_slice %139 {offsets = [0, 0], sizes = [2, 32], strides = [1, 1]} : vector<2x128xf32> to vector<2x32xf32>
    %141 = arith.negf %140 : vector<2x32xf32>
    %142 = math.exp %141 : vector<2x32xf32>
    %cst_41 = arith.constant 1.000000e+00 : f32
    %143 = vector.broadcast %cst_41 : f32 to vector<2x32xf32>
    %144 = arith.addf %143, %142 : vector<2x32xf32>
    %145 = arith.divf %143, %144 : vector<2x32xf32>
    %146 = vector.extract_strided_slice %139 {offsets = [0, 32], sizes = [2, 32], strides = [1, 1]} : vector<2x128xf32> to vector<2x32xf32>
    %147 = arith.negf %146 : vector<2x32xf32>
    %148 = math.exp %147 : vector<2x32xf32>
    %cst_42 = arith.constant 1.000000e+00 : f32
    %149 = vector.broadcast %cst_42 : f32 to vector<2x32xf32>
    %150 = arith.addf %149, %148 : vector<2x32xf32>
    %151 = arith.divf %149, %150 : vector<2x32xf32>
    %152 = vector.extract_strided_slice %139 {offsets = [0, 64], sizes = [2, 32], strides = [1, 1]} : vector<2x128xf32> to vector<2x32xf32>
    %153 = math.tanh %152 : vector<2x32xf32>
    %154 = vector.extract_strided_slice %139 {offsets = [0, 96], sizes = [2, 32], strides = [1, 1]} : vector<2x128xf32> to vector<2x32xf32>
    %155 = arith.negf %154 : vector<2x32xf32>
    %156 = math.exp %155 : vector<2x32xf32>
    %cst_43 = arith.constant 1.000000e+00 : f32
    %157 = vector.broadcast %cst_43 : f32 to vector<2x32xf32>
    %158 = arith.addf %157, %156 : vector<2x32xf32>
    %159 = arith.divf %157, %158 : vector<2x32xf32>
    %160 = arith.mulf %151, %134 : vector<2x32xf32>
    %161 = arith.mulf %145, %153 : vector<2x32xf32>
    %162 = arith.addf %160, %161 : vector<2x32xf32>
    %163 = math.tanh %162 : vector<2x32xf32>
    %164 = arith.mulf %159, %163 : vector<2x32xf32>
    %165 = vector.extract_strided_slice %21 {offsets = [10, 0], sizes = [2, 128], strides = [1, 1]} : vector<16x128xf32> to vector<2x128xf32>
    %cst_44 = arith.constant dense<0.000000e+00> : vector<2x128xf32>
    %166 = tpu.matmul %164, %22, %cst_44 {dimension_numbers = #tpu.dot_dimension_numbers<[1], [0], [0], [1], [0, 0, 1, 1], [], []>} : vector<2x32xf32>, vector<32x128xf32>, vector<2x128xf32> -> vector<2x128xf32>
    %167 = arith.addf %165, %166 : vector<2x128xf32>
    %168 = vector.extract_strided_slice %167 {offsets = [0, 0], sizes = [2, 32], strides = [1, 1]} : vector<2x128xf32> to vector<2x32xf32>
    %169 = arith.negf %168 : vector<2x32xf32>
    %170 = math.exp %169 : vector<2x32xf32>
    %cst_45 = arith.constant 1.000000e+00 : f32
    %171 = vector.broadcast %cst_45 : f32 to vector<2x32xf32>
    %172 = arith.addf %171, %170 : vector<2x32xf32>
    %173 = arith.divf %171, %172 : vector<2x32xf32>
    %174 = vector.extract_strided_slice %167 {offsets = [0, 32], sizes = [2, 32], strides = [1, 1]} : vector<2x128xf32> to vector<2x32xf32>
    %175 = arith.negf %174 : vector<2x32xf32>
    %176 = math.exp %175 : vector<2x32xf32>
    %cst_46 = arith.constant 1.000000e+00 : f32
    %177 = vector.broadcast %cst_46 : f32 to vector<2x32xf32>
    %178 = arith.addf %177, %176 : vector<2x32xf32>
    %179 = arith.divf %177, %178 : vector<2x32xf32>
    %180 = vector.extract_strided_slice %167 {offsets = [0, 64], sizes = [2, 32], strides = [1, 1]} : vector<2x128xf32> to vector<2x32xf32>
    %181 = math.tanh %180 : vector<2x32xf32>
    %182 = vector.extract_strided_slice %167 {offsets = [0, 96], sizes = [2, 32], strides = [1, 1]} : vector<2x128xf32> to vector<2x32xf32>
    %183 = arith.negf %182 : vector<2x32xf32>
    %184 = math.exp %183 : vector<2x32xf32>
    %cst_47 = arith.constant 1.000000e+00 : f32
    %185 = vector.broadcast %cst_47 : f32 to vector<2x32xf32>
    %186 = arith.addf %185, %184 : vector<2x32xf32>
    %187 = arith.divf %185, %186 : vector<2x32xf32>
    %188 = arith.mulf %179, %162 : vector<2x32xf32>
    %189 = arith.mulf %173, %181 : vector<2x32xf32>
    %190 = arith.addf %188, %189 : vector<2x32xf32>
    %191 = math.tanh %190 : vector<2x32xf32>
    %192 = arith.mulf %187, %191 : vector<2x32xf32>
    %193 = vector.extract_strided_slice %21 {offsets = [12, 0], sizes = [2, 128], strides = [1, 1]} : vector<16x128xf32> to vector<2x128xf32>
    %cst_48 = arith.constant dense<0.000000e+00> : vector<2x128xf32>
    %194 = tpu.matmul %192, %22, %cst_48 {dimension_numbers = #tpu.dot_dimension_numbers<[1], [0], [0], [1], [0, 0, 1, 1], [], []>} : vector<2x32xf32>, vector<32x128xf32>, vector<2x128xf32> -> vector<2x128xf32>
    %195 = arith.addf %193, %194 : vector<2x128xf32>
    %196 = vector.extract_strided_slice %195 {offsets = [0, 0], sizes = [2, 32], strides = [1, 1]} : vector<2x128xf32> to vector<2x32xf32>
    %197 = arith.negf %196 : vector<2x32xf32>
    %198 = math.exp %197 : vector<2x32xf32>
    %cst_49 = arith.constant 1.000000e+00 : f32
    %199 = vector.broadcast %cst_49 : f32 to vector<2x32xf32>
    %200 = arith.addf %199, %198 : vector<2x32xf32>
    %201 = arith.divf %199, %200 : vector<2x32xf32>
    %202 = vector.extract_strided_slice %195 {offsets = [0, 32], sizes = [2, 32], strides = [1, 1]} : vector<2x128xf32> to vector<2x32xf32>
    %203 = arith.negf %202 : vector<2x32xf32>
    %204 = math.exp %203 : vector<2x32xf32>
    %cst_50 = arith.constant 1.000000e+00 : f32
    %205 = vector.broadcast %cst_50 : f32 to vector<2x32xf32>
    %206 = arith.addf %205, %204 : vector<2x32xf32>
    %207 = arith.divf %205, %206 : vector<2x32xf32>
    %208 = vector.extract_strided_slice %195 {offsets = [0, 64], sizes = [2, 32], strides = [1, 1]} : vector<2x128xf32> to vector<2x32xf32>
    %209 = math.tanh %208 : vector<2x32xf32>
    %210 = vector.extract_strided_slice %195 {offsets = [0, 96], sizes = [2, 32], strides = [1, 1]} : vector<2x128xf32> to vector<2x32xf32>
    %211 = arith.negf %210 : vector<2x32xf32>
    %212 = math.exp %211 : vector<2x32xf32>
    %cst_51 = arith.constant 1.000000e+00 : f32
    %213 = vector.broadcast %cst_51 : f32 to vector<2x32xf32>
    %214 = arith.addf %213, %212 : vector<2x32xf32>
    %215 = arith.divf %213, %214 : vector<2x32xf32>
    %216 = arith.mulf %207, %190 : vector<2x32xf32>
    %217 = arith.mulf %201, %209 : vector<2x32xf32>
    %218 = arith.addf %216, %217 : vector<2x32xf32>
    %219 = math.tanh %218 : vector<2x32xf32>
    %220 = arith.mulf %215, %219 : vector<2x32xf32>
    %221 = vector.extract_strided_slice %21 {offsets = [14, 0], sizes = [2, 128], strides = [1, 1]} : vector<16x128xf32> to vector<2x128xf32>
    %cst_52 = arith.constant dense<0.000000e+00> : vector<2x128xf32>
    %222 = tpu.matmul %220, %22, %cst_52 {dimension_numbers = #tpu.dot_dimension_numbers<[1], [0], [0], [1], [0, 0, 1, 1], [], []>} : vector<2x32xf32>, vector<32x128xf32>, vector<2x128xf32> -> vector<2x128xf32>
    %223 = arith.addf %221, %222 : vector<2x128xf32>
    %224 = vector.extract_strided_slice %223 {offsets = [0, 0], sizes = [2, 32], strides = [1, 1]} : vector<2x128xf32> to vector<2x32xf32>
    %225 = arith.negf %224 : vector<2x32xf32>
    %226 = math.exp %225 : vector<2x32xf32>
    %cst_53 = arith.constant 1.000000e+00 : f32
    %227 = vector.broadcast %cst_53 : f32 to vector<2x32xf32>
    %228 = arith.addf %227, %226 : vector<2x32xf32>
    %229 = arith.divf %227, %228 : vector<2x32xf32>
    %230 = vector.extract_strided_slice %223 {offsets = [0, 32], sizes = [2, 32], strides = [1, 1]} : vector<2x128xf32> to vector<2x32xf32>
    %231 = arith.negf %230 : vector<2x32xf32>
    %232 = math.exp %231 : vector<2x32xf32>
    %cst_54 = arith.constant 1.000000e+00 : f32
    %233 = vector.broadcast %cst_54 : f32 to vector<2x32xf32>
    %234 = arith.addf %233, %232 : vector<2x32xf32>
    %235 = arith.divf %233, %234 : vector<2x32xf32>
    %236 = vector.extract_strided_slice %223 {offsets = [0, 64], sizes = [2, 32], strides = [1, 1]} : vector<2x128xf32> to vector<2x32xf32>
    %237 = math.tanh %236 : vector<2x32xf32>
    %238 = vector.extract_strided_slice %223 {offsets = [0, 96], sizes = [2, 32], strides = [1, 1]} : vector<2x128xf32> to vector<2x32xf32>
    %239 = arith.negf %238 : vector<2x32xf32>
    %240 = math.exp %239 : vector<2x32xf32>
    %cst_55 = arith.constant 1.000000e+00 : f32
    %241 = vector.broadcast %cst_55 : f32 to vector<2x32xf32>
    %242 = arith.addf %241, %240 : vector<2x32xf32>
    %243 = arith.divf %241, %242 : vector<2x32xf32>
    %244 = arith.mulf %235, %218 : vector<2x32xf32>
    %245 = arith.mulf %229, %237 : vector<2x32xf32>
    %246 = arith.addf %244, %245 : vector<2x32xf32>
    %247 = math.tanh %246 : vector<2x32xf32>
    %248 = arith.mulf %243, %247 : vector<2x32xf32>
    %249 = tpu.concatenate %52, %80, %108, %136, %164, %192, %220, %248 in 0 : vector<2x32xf32>, vector<2x32xf32>, vector<2x32xf32>, vector<2x32xf32>, vector<2x32xf32>, vector<2x32xf32>, vector<2x32xf32>, vector<2x32xf32> -> vector<16x32xf32>
    %c0_56 = arith.constant 0 : index
    %c0_57 = arith.constant 0 : index
    %250 = vector.load %arg4[%c0_56, %c0_57] : memref<32x128xf32, #tpu.memory_space<vmem>>, vector<32x128xf32>
    %cst_58 = arith.constant dense<0.000000e+00> : vector<16x128xf32>
    %251 = tpu.matmul %249, %250, %cst_58 {dimension_numbers = #tpu.dot_dimension_numbers<[1], [0], [0], [1], [0, 0, 1, 1], [], []>} : vector<16x32xf32>, vector<32x128xf32>, vector<16x128xf32> -> vector<16x128xf32>
    %c0_59 = arith.constant 0 : index
    %c0_60 = arith.constant 0 : index
    %252 = vector.load %arg6[%c0_59, %c0_60] : memref<1x128xf32, #tpu.memory_space<vmem>>, vector<1x128xf32>
    %253 = vector.broadcast %252 : vector<1x128xf32> to vector<16x128xf32>
    %254 = arith.addf %251, %253 : vector<16x128xf32>
    %c0_61 = arith.constant 0 : index
    %c0_62 = arith.constant 0 : index
    %255 = vector.load %arg5[%c0_61, %c0_62] : memref<32x128xf32, #tpu.memory_space<vmem>>, vector<32x128xf32>
    %cst_63 = arith.constant 0.000000e+00 : f32
    %256 = vector.broadcast %cst_63 : f32 to vector<2x32xf32>
    %cst_64 = arith.constant 0.000000e+00 : f32
    %257 = vector.broadcast %cst_64 : f32 to vector<2x32xf32>
    %258 = vector.extract_strided_slice %254 {offsets = [0, 0], sizes = [2, 128], strides = [1, 1]} : vector<16x128xf32> to vector<2x128xf32>
    %cst_65 = arith.constant dense<0.000000e+00> : vector<2x128xf32>
    %259 = tpu.matmul %256, %255, %cst_65 {dimension_numbers = #tpu.dot_dimension_numbers<[1], [0], [0], [1], [0, 0, 1, 1], [], []>} : vector<2x32xf32>, vector<32x128xf32>, vector<2x128xf32> -> vector<2x128xf32>
    %260 = arith.addf %258, %259 : vector<2x128xf32>
    %261 = vector.extract_strided_slice %260 {offsets = [0, 0], sizes = [2, 32], strides = [1, 1]} : vector<2x128xf32> to vector<2x32xf32>
    %262 = arith.negf %261 : vector<2x32xf32>
    %263 = math.exp %262 : vector<2x32xf32>
    %cst_66 = arith.constant 1.000000e+00 : f32
    %264 = vector.broadcast %cst_66 : f32 to vector<2x32xf32>
    %265 = arith.addf %264, %263 : vector<2x32xf32>
    %266 = arith.divf %264, %265 : vector<2x32xf32>
    %267 = vector.extract_strided_slice %260 {offsets = [0, 32], sizes = [2, 32], strides = [1, 1]} : vector<2x128xf32> to vector<2x32xf32>
    %268 = arith.negf %267 : vector<2x32xf32>
    %269 = math.exp %268 : vector<2x32xf32>
    %cst_67 = arith.constant 1.000000e+00 : f32
    %270 = vector.broadcast %cst_67 : f32 to vector<2x32xf32>
    %271 = arith.addf %270, %269 : vector<2x32xf32>
    %272 = arith.divf %270, %271 : vector<2x32xf32>
    %273 = vector.extract_strided_slice %260 {offsets = [0, 64], sizes = [2, 32], strides = [1, 1]} : vector<2x128xf32> to vector<2x32xf32>
    %274 = math.tanh %273 : vector<2x32xf32>
    %275 = vector.extract_strided_slice %260 {offsets = [0, 96], sizes = [2, 32], strides = [1, 1]} : vector<2x128xf32> to vector<2x32xf32>
    %276 = arith.negf %275 : vector<2x32xf32>
    %277 = math.exp %276 : vector<2x32xf32>
    %cst_68 = arith.constant 1.000000e+00 : f32
    %278 = vector.broadcast %cst_68 : f32 to vector<2x32xf32>
    %279 = arith.addf %278, %277 : vector<2x32xf32>
    %280 = arith.divf %278, %279 : vector<2x32xf32>
    %281 = arith.mulf %272, %257 : vector<2x32xf32>
    %282 = arith.mulf %266, %274 : vector<2x32xf32>
    %283 = arith.addf %281, %282 : vector<2x32xf32>
    %284 = math.tanh %283 : vector<2x32xf32>
    %285 = arith.mulf %280, %284 : vector<2x32xf32>
    %286 = vector.extract_strided_slice %254 {offsets = [2, 0], sizes = [2, 128], strides = [1, 1]} : vector<16x128xf32> to vector<2x128xf32>
    %cst_69 = arith.constant dense<0.000000e+00> : vector<2x128xf32>
    %287 = tpu.matmul %285, %255, %cst_69 {dimension_numbers = #tpu.dot_dimension_numbers<[1], [0], [0], [1], [0, 0, 1, 1], [], []>} : vector<2x32xf32>, vector<32x128xf32>, vector<2x128xf32> -> vector<2x128xf32>
    %288 = arith.addf %286, %287 : vector<2x128xf32>
    %289 = vector.extract_strided_slice %288 {offsets = [0, 0], sizes = [2, 32], strides = [1, 1]} : vector<2x128xf32> to vector<2x32xf32>
    %290 = arith.negf %289 : vector<2x32xf32>
    %291 = math.exp %290 : vector<2x32xf32>
    %cst_70 = arith.constant 1.000000e+00 : f32
    %292 = vector.broadcast %cst_70 : f32 to vector<2x32xf32>
    %293 = arith.addf %292, %291 : vector<2x32xf32>
    %294 = arith.divf %292, %293 : vector<2x32xf32>
    %295 = vector.extract_strided_slice %288 {offsets = [0, 32], sizes = [2, 32], strides = [1, 1]} : vector<2x128xf32> to vector<2x32xf32>
    %296 = arith.negf %295 : vector<2x32xf32>
    %297 = math.exp %296 : vector<2x32xf32>
    %cst_71 = arith.constant 1.000000e+00 : f32
    %298 = vector.broadcast %cst_71 : f32 to vector<2x32xf32>
    %299 = arith.addf %298, %297 : vector<2x32xf32>
    %300 = arith.divf %298, %299 : vector<2x32xf32>
    %301 = vector.extract_strided_slice %288 {offsets = [0, 64], sizes = [2, 32], strides = [1, 1]} : vector<2x128xf32> to vector<2x32xf32>
    %302 = math.tanh %301 : vector<2x32xf32>
    %303 = vector.extract_strided_slice %288 {offsets = [0, 96], sizes = [2, 32], strides = [1, 1]} : vector<2x128xf32> to vector<2x32xf32>
    %304 = arith.negf %303 : vector<2x32xf32>
    %305 = math.exp %304 : vector<2x32xf32>
    %cst_72 = arith.constant 1.000000e+00 : f32
    %306 = vector.broadcast %cst_72 : f32 to vector<2x32xf32>
    %307 = arith.addf %306, %305 : vector<2x32xf32>
    %308 = arith.divf %306, %307 : vector<2x32xf32>
    %309 = arith.mulf %300, %283 : vector<2x32xf32>
    %310 = arith.mulf %294, %302 : vector<2x32xf32>
    %311 = arith.addf %309, %310 : vector<2x32xf32>
    %312 = math.tanh %311 : vector<2x32xf32>
    %313 = arith.mulf %308, %312 : vector<2x32xf32>
    %314 = vector.extract_strided_slice %254 {offsets = [4, 0], sizes = [2, 128], strides = [1, 1]} : vector<16x128xf32> to vector<2x128xf32>
    %cst_73 = arith.constant dense<0.000000e+00> : vector<2x128xf32>
    %315 = tpu.matmul %313, %255, %cst_73 {dimension_numbers = #tpu.dot_dimension_numbers<[1], [0], [0], [1], [0, 0, 1, 1], [], []>} : vector<2x32xf32>, vector<32x128xf32>, vector<2x128xf32> -> vector<2x128xf32>
    %316 = arith.addf %314, %315 : vector<2x128xf32>
    %317 = vector.extract_strided_slice %316 {offsets = [0, 0], sizes = [2, 32], strides = [1, 1]} : vector<2x128xf32> to vector<2x32xf32>
    %318 = arith.negf %317 : vector<2x32xf32>
    %319 = math.exp %318 : vector<2x32xf32>
    %cst_74 = arith.constant 1.000000e+00 : f32
    %320 = vector.broadcast %cst_74 : f32 to vector<2x32xf32>
    %321 = arith.addf %320, %319 : vector<2x32xf32>
    %322 = arith.divf %320, %321 : vector<2x32xf32>
    %323 = vector.extract_strided_slice %316 {offsets = [0, 32], sizes = [2, 32], strides = [1, 1]} : vector<2x128xf32> to vector<2x32xf32>
    %324 = arith.negf %323 : vector<2x32xf32>
    %325 = math.exp %324 : vector<2x32xf32>
    %cst_75 = arith.constant 1.000000e+00 : f32
    %326 = vector.broadcast %cst_75 : f32 to vector<2x32xf32>
    %327 = arith.addf %326, %325 : vector<2x32xf32>
    %328 = arith.divf %326, %327 : vector<2x32xf32>
    %329 = vector.extract_strided_slice %316 {offsets = [0, 64], sizes = [2, 32], strides = [1, 1]} : vector<2x128xf32> to vector<2x32xf32>
    %330 = math.tanh %329 : vector<2x32xf32>
    %331 = vector.extract_strided_slice %316 {offsets = [0, 96], sizes = [2, 32], strides = [1, 1]} : vector<2x128xf32> to vector<2x32xf32>
    %332 = arith.negf %331 : vector<2x32xf32>
    %333 = math.exp %332 : vector<2x32xf32>
    %cst_76 = arith.constant 1.000000e+00 : f32
    %334 = vector.broadcast %cst_76 : f32 to vector<2x32xf32>
    %335 = arith.addf %334, %333 : vector<2x32xf32>
    %336 = arith.divf %334, %335 : vector<2x32xf32>
    %337 = arith.mulf %328, %311 : vector<2x32xf32>
    %338 = arith.mulf %322, %330 : vector<2x32xf32>
    %339 = arith.addf %337, %338 : vector<2x32xf32>
    %340 = math.tanh %339 : vector<2x32xf32>
    %341 = arith.mulf %336, %340 : vector<2x32xf32>
    %342 = vector.extract_strided_slice %254 {offsets = [6, 0], sizes = [2, 128], strides = [1, 1]} : vector<16x128xf32> to vector<2x128xf32>
    %cst_77 = arith.constant dense<0.000000e+00> : vector<2x128xf32>
    %343 = tpu.matmul %341, %255, %cst_77 {dimension_numbers = #tpu.dot_dimension_numbers<[1], [0], [0], [1], [0, 0, 1, 1], [], []>} : vector<2x32xf32>, vector<32x128xf32>, vector<2x128xf32> -> vector<2x128xf32>
    %344 = arith.addf %342, %343 : vector<2x128xf32>
    %345 = vector.extract_strided_slice %344 {offsets = [0, 0], sizes = [2, 32], strides = [1, 1]} : vector<2x128xf32> to vector<2x32xf32>
    %346 = arith.negf %345 : vector<2x32xf32>
    %347 = math.exp %346 : vector<2x32xf32>
    %cst_78 = arith.constant 1.000000e+00 : f32
    %348 = vector.broadcast %cst_78 : f32 to vector<2x32xf32>
    %349 = arith.addf %348, %347 : vector<2x32xf32>
    %350 = arith.divf %348, %349 : vector<2x32xf32>
    %351 = vector.extract_strided_slice %344 {offsets = [0, 32], sizes = [2, 32], strides = [1, 1]} : vector<2x128xf32> to vector<2x32xf32>
    %352 = arith.negf %351 : vector<2x32xf32>
    %353 = math.exp %352 : vector<2x32xf32>
    %cst_79 = arith.constant 1.000000e+00 : f32
    %354 = vector.broadcast %cst_79 : f32 to vector<2x32xf32>
    %355 = arith.addf %354, %353 : vector<2x32xf32>
    %356 = arith.divf %354, %355 : vector<2x32xf32>
    %357 = vector.extract_strided_slice %344 {offsets = [0, 64], sizes = [2, 32], strides = [1, 1]} : vector<2x128xf32> to vector<2x32xf32>
    %358 = math.tanh %357 : vector<2x32xf32>
    %359 = vector.extract_strided_slice %344 {offsets = [0, 96], sizes = [2, 32], strides = [1, 1]} : vector<2x128xf32> to vector<2x32xf32>
    %360 = arith.negf %359 : vector<2x32xf32>
    %361 = math.exp %360 : vector<2x32xf32>
    %cst_80 = arith.constant 1.000000e+00 : f32
    %362 = vector.broadcast %cst_80 : f32 to vector<2x32xf32>
    %363 = arith.addf %362, %361 : vector<2x32xf32>
    %364 = arith.divf %362, %363 : vector<2x32xf32>
    %365 = arith.mulf %356, %339 : vector<2x32xf32>
    %366 = arith.mulf %350, %358 : vector<2x32xf32>
    %367 = arith.addf %365, %366 : vector<2x32xf32>
    %368 = math.tanh %367 : vector<2x32xf32>
    %369 = arith.mulf %364, %368 : vector<2x32xf32>
    %370 = vector.extract_strided_slice %254 {offsets = [8, 0], sizes = [2, 128], strides = [1, 1]} : vector<16x128xf32> to vector<2x128xf32>
    %cst_81 = arith.constant dense<0.000000e+00> : vector<2x128xf32>
    %371 = tpu.matmul %369, %255, %cst_81 {dimension_numbers = #tpu.dot_dimension_numbers<[1], [0], [0], [1], [0, 0, 1, 1], [], []>} : vector<2x32xf32>, vector<32x128xf32>, vector<2x128xf32> -> vector<2x128xf32>
    %372 = arith.addf %370, %371 : vector<2x128xf32>
    %373 = vector.extract_strided_slice %372 {offsets = [0, 0], sizes = [2, 32], strides = [1, 1]} : vector<2x128xf32> to vector<2x32xf32>
    %374 = arith.negf %373 : vector<2x32xf32>
    %375 = math.exp %374 : vector<2x32xf32>
    %cst_82 = arith.constant 1.000000e+00 : f32
    %376 = vector.broadcast %cst_82 : f32 to vector<2x32xf32>
    %377 = arith.addf %376, %375 : vector<2x32xf32>
    %378 = arith.divf %376, %377 : vector<2x32xf32>
    %379 = vector.extract_strided_slice %372 {offsets = [0, 32], sizes = [2, 32], strides = [1, 1]} : vector<2x128xf32> to vector<2x32xf32>
    %380 = arith.negf %379 : vector<2x32xf32>
    %381 = math.exp %380 : vector<2x32xf32>
    %cst_83 = arith.constant 1.000000e+00 : f32
    %382 = vector.broadcast %cst_83 : f32 to vector<2x32xf32>
    %383 = arith.addf %382, %381 : vector<2x32xf32>
    %384 = arith.divf %382, %383 : vector<2x32xf32>
    %385 = vector.extract_strided_slice %372 {offsets = [0, 64], sizes = [2, 32], strides = [1, 1]} : vector<2x128xf32> to vector<2x32xf32>
    %386 = math.tanh %385 : vector<2x32xf32>
    %387 = vector.extract_strided_slice %372 {offsets = [0, 96], sizes = [2, 32], strides = [1, 1]} : vector<2x128xf32> to vector<2x32xf32>
    %388 = arith.negf %387 : vector<2x32xf32>
    %389 = math.exp %388 : vector<2x32xf32>
    %cst_84 = arith.constant 1.000000e+00 : f32
    %390 = vector.broadcast %cst_84 : f32 to vector<2x32xf32>
    %391 = arith.addf %390, %389 : vector<2x32xf32>
    %392 = arith.divf %390, %391 : vector<2x32xf32>
    %393 = arith.mulf %384, %367 : vector<2x32xf32>
    %394 = arith.mulf %378, %386 : vector<2x32xf32>
    %395 = arith.addf %393, %394 : vector<2x32xf32>
    %396 = math.tanh %395 : vector<2x32xf32>
    %397 = arith.mulf %392, %396 : vector<2x32xf32>
    %398 = vector.extract_strided_slice %254 {offsets = [10, 0], sizes = [2, 128], strides = [1, 1]} : vector<16x128xf32> to vector<2x128xf32>
    %cst_85 = arith.constant dense<0.000000e+00> : vector<2x128xf32>
    %399 = tpu.matmul %397, %255, %cst_85 {dimension_numbers = #tpu.dot_dimension_numbers<[1], [0], [0], [1], [0, 0, 1, 1], [], []>} : vector<2x32xf32>, vector<32x128xf32>, vector<2x128xf32> -> vector<2x128xf32>
    %400 = arith.addf %398, %399 : vector<2x128xf32>
    %401 = vector.extract_strided_slice %400 {offsets = [0, 0], sizes = [2, 32], strides = [1, 1]} : vector<2x128xf32> to vector<2x32xf32>
    %402 = arith.negf %401 : vector<2x32xf32>
    %403 = math.exp %402 : vector<2x32xf32>
    %cst_86 = arith.constant 1.000000e+00 : f32
    %404 = vector.broadcast %cst_86 : f32 to vector<2x32xf32>
    %405 = arith.addf %404, %403 : vector<2x32xf32>
    %406 = arith.divf %404, %405 : vector<2x32xf32>
    %407 = vector.extract_strided_slice %400 {offsets = [0, 32], sizes = [2, 32], strides = [1, 1]} : vector<2x128xf32> to vector<2x32xf32>
    %408 = arith.negf %407 : vector<2x32xf32>
    %409 = math.exp %408 : vector<2x32xf32>
    %cst_87 = arith.constant 1.000000e+00 : f32
    %410 = vector.broadcast %cst_87 : f32 to vector<2x32xf32>
    %411 = arith.addf %410, %409 : vector<2x32xf32>
    %412 = arith.divf %410, %411 : vector<2x32xf32>
    %413 = vector.extract_strided_slice %400 {offsets = [0, 64], sizes = [2, 32], strides = [1, 1]} : vector<2x128xf32> to vector<2x32xf32>
    %414 = math.tanh %413 : vector<2x32xf32>
    %415 = vector.extract_strided_slice %400 {offsets = [0, 96], sizes = [2, 32], strides = [1, 1]} : vector<2x128xf32> to vector<2x32xf32>
    %416 = arith.negf %415 : vector<2x32xf32>
    %417 = math.exp %416 : vector<2x32xf32>
    %cst_88 = arith.constant 1.000000e+00 : f32
    %418 = vector.broadcast %cst_88 : f32 to vector<2x32xf32>
    %419 = arith.addf %418, %417 : vector<2x32xf32>
    %420 = arith.divf %418, %419 : vector<2x32xf32>
    %421 = arith.mulf %412, %395 : vector<2x32xf32>
    %422 = arith.mulf %406, %414 : vector<2x32xf32>
    %423 = arith.addf %421, %422 : vector<2x32xf32>
    %424 = math.tanh %423 : vector<2x32xf32>
    %425 = arith.mulf %420, %424 : vector<2x32xf32>
    %426 = vector.extract_strided_slice %254 {offsets = [12, 0], sizes = [2, 128], strides = [1, 1]} : vector<16x128xf32> to vector<2x128xf32>
    %cst_89 = arith.constant dense<0.000000e+00> : vector<2x128xf32>
    %427 = tpu.matmul %425, %255, %cst_89 {dimension_numbers = #tpu.dot_dimension_numbers<[1], [0], [0], [1], [0, 0, 1, 1], [], []>} : vector<2x32xf32>, vector<32x128xf32>, vector<2x128xf32> -> vector<2x128xf32>
    %428 = arith.addf %426, %427 : vector<2x128xf32>
    %429 = vector.extract_strided_slice %428 {offsets = [0, 0], sizes = [2, 32], strides = [1, 1]} : vector<2x128xf32> to vector<2x32xf32>
    %430 = arith.negf %429 : vector<2x32xf32>
    %431 = math.exp %430 : vector<2x32xf32>
    %cst_90 = arith.constant 1.000000e+00 : f32
    %432 = vector.broadcast %cst_90 : f32 to vector<2x32xf32>
    %433 = arith.addf %432, %431 : vector<2x32xf32>
    %434 = arith.divf %432, %433 : vector<2x32xf32>
    %435 = vector.extract_strided_slice %428 {offsets = [0, 32], sizes = [2, 32], strides = [1, 1]} : vector<2x128xf32> to vector<2x32xf32>
    %436 = arith.negf %435 : vector<2x32xf32>
    %437 = math.exp %436 : vector<2x32xf32>
    %cst_91 = arith.constant 1.000000e+00 : f32
    %438 = vector.broadcast %cst_91 : f32 to vector<2x32xf32>
    %439 = arith.addf %438, %437 : vector<2x32xf32>
    %440 = arith.divf %438, %439 : vector<2x32xf32>
    %441 = vector.extract_strided_slice %428 {offsets = [0, 64], sizes = [2, 32], strides = [1, 1]} : vector<2x128xf32> to vector<2x32xf32>
    %442 = math.tanh %441 : vector<2x32xf32>
    %443 = vector.extract_strided_slice %428 {offsets = [0, 96], sizes = [2, 32], strides = [1, 1]} : vector<2x128xf32> to vector<2x32xf32>
    %444 = arith.negf %443 : vector<2x32xf32>
    %445 = math.exp %444 : vector<2x32xf32>
    %cst_92 = arith.constant 1.000000e+00 : f32
    %446 = vector.broadcast %cst_92 : f32 to vector<2x32xf32>
    %447 = arith.addf %446, %445 : vector<2x32xf32>
    %448 = arith.divf %446, %447 : vector<2x32xf32>
    %449 = arith.mulf %440, %423 : vector<2x32xf32>
    %450 = arith.mulf %434, %442 : vector<2x32xf32>
    %451 = arith.addf %449, %450 : vector<2x32xf32>
    %452 = math.tanh %451 : vector<2x32xf32>
    %453 = arith.mulf %448, %452 : vector<2x32xf32>
    %454 = vector.extract_strided_slice %254 {offsets = [14, 0], sizes = [2, 128], strides = [1, 1]} : vector<16x128xf32> to vector<2x128xf32>
    %cst_93 = arith.constant dense<0.000000e+00> : vector<2x128xf32>
    %455 = tpu.matmul %453, %255, %cst_93 {dimension_numbers = #tpu.dot_dimension_numbers<[1], [0], [0], [1], [0, 0, 1, 1], [], []>} : vector<2x32xf32>, vector<32x128xf32>, vector<2x128xf32> -> vector<2x128xf32>
    %456 = arith.addf %454, %455 : vector<2x128xf32>
    %457 = vector.extract_strided_slice %456 {offsets = [0, 0], sizes = [2, 32], strides = [1, 1]} : vector<2x128xf32> to vector<2x32xf32>
    %458 = arith.negf %457 : vector<2x32xf32>
    %459 = math.exp %458 : vector<2x32xf32>
    %cst_94 = arith.constant 1.000000e+00 : f32
    %460 = vector.broadcast %cst_94 : f32 to vector<2x32xf32>
    %461 = arith.addf %460, %459 : vector<2x32xf32>
    %462 = arith.divf %460, %461 : vector<2x32xf32>
    %463 = vector.extract_strided_slice %456 {offsets = [0, 32], sizes = [2, 32], strides = [1, 1]} : vector<2x128xf32> to vector<2x32xf32>
    %464 = arith.negf %463 : vector<2x32xf32>
    %465 = math.exp %464 : vector<2x32xf32>
    %cst_95 = arith.constant 1.000000e+00 : f32
    %466 = vector.broadcast %cst_95 : f32 to vector<2x32xf32>
    %467 = arith.addf %466, %465 : vector<2x32xf32>
    %468 = arith.divf %466, %467 : vector<2x32xf32>
    %469 = vector.extract_strided_slice %456 {offsets = [0, 64], sizes = [2, 32], strides = [1, 1]} : vector<2x128xf32> to vector<2x32xf32>
    %470 = math.tanh %469 : vector<2x32xf32>
    %471 = vector.extract_strided_slice %456 {offsets = [0, 96], sizes = [2, 32], strides = [1, 1]} : vector<2x128xf32> to vector<2x32xf32>
    %472 = arith.negf %471 : vector<2x32xf32>
    %473 = math.exp %472 : vector<2x32xf32>
    %cst_96 = arith.constant 1.000000e+00 : f32
    %474 = vector.broadcast %cst_96 : f32 to vector<2x32xf32>
    %475 = arith.addf %474, %473 : vector<2x32xf32>
    %476 = arith.divf %474, %475 : vector<2x32xf32>
    %477 = arith.mulf %468, %451 : vector<2x32xf32>
    %478 = arith.mulf %462, %470 : vector<2x32xf32>
    %479 = arith.addf %477, %478 : vector<2x32xf32>
    %480 = math.tanh %479 : vector<2x32xf32>
    %481 = arith.mulf %476, %480 : vector<2x32xf32>
    %c0_97 = arith.constant 0 : index
    %c0_98 = arith.constant 0 : index
    %482 = vector.load %arg7[%c0_97, %c0_98] : memref<32x1xf32, #tpu.memory_space<vmem>>, vector<32x1xf32>
    %cst_99 = arith.constant dense<0.000000e+00> : vector<2x1xf32>
    %483 = tpu.matmul %481, %482, %cst_99 {dimension_numbers = #tpu.dot_dimension_numbers<[1], [0], [0], [1], [0, 0, 1, 1], [], []>} : vector<2x32xf32>, vector<32x1xf32>, vector<2x1xf32> -> vector<2x1xf32>
    %c0_100 = arith.constant 0 : index
    %c0_101 = arith.constant 0 : index
    %484 = vector.load %arg8[%c0_100, %c0_101] : memref<1x1xf32, #tpu.memory_space<vmem>>, vector<1x1xf32>
    %485 = vector.broadcast %484 : vector<1x1xf32> to vector<2x1xf32>
    %486 = arith.addf %483, %485 : vector<2x1xf32>
    %c0_102 = arith.constant 0 : index
    %c0_103 = arith.constant 0 : index
    %487 = vector.load %arg9[%c0_102, %c0_103] : memref<2x1xf32, #tpu.memory_space<vmem>>, vector<2x1xf32>
    tpu.vector_store %arg9[%c0_102, %c0_103], %486 {strides = array<i32>} : memref<2x1xf32, #tpu.memory_space<vmem>>, vector<2x1xf32>,
    return
  }
}

</mosaic_0001>

<llo_original>
// kernel: lstm_forecaster_forward.1
$region0: #{lstm_forecaster_forward.1}
  #allocation0 [shape = 'u32[]', space=smem, size = 0x4, offset = 0x4, fixed_abs, tag = 'smem constant byte address 0x4 - core index']
  #allocation1 [shape = 'u32[144,128]{1,0:T(1,128)}', space=vmem, size = 0x12000, scoped, tag = 'internal scratch']
  #allocation2 [shape = 'f32[1,1]{1,0:T(1,128)S(1)}', space=vmem, size = 0x200, scoped, tag = 'scoped memory for lstm_forecaster_forward.1']
  %s0 = inlined_call_operand.vmem [shape: f32[2,8,4], index: 0, kind: input, shape index: {}]
  %s1 = inlined_call_operand.hbm [shape: f32[4,128], index: 1, kind: input, shape index: {}]
  %s2 = inlined_call_operand.vmem [shape: f32[32,128], index: 2, kind: input, shape index: {}]
  %s3 = inlined_call_operand.vmem [shape: f32[1,128], index: 3, kind: input, shape index: {}]
  %s4 = inlined_call_operand.vmem [shape: f32[32,128], index: 4, kind: input, shape index: {}]
  %s5 = inlined_call_operand.hbm [shape: f32[32,128], index: 5, kind: input, shape index: {}]
  %s6 = inlined_call_operand.vmem [shape: f32[1,128], index: 6, kind: input, shape index: {}]
  %s7 = inlined_call_operand.vmem [shape: f32[32,1], index: 7, kind: input, shape index: {}]
  %s8 = inlined_call_operand.<no memory space> [shape: f32[1,1], index: 8, kind: input, shape index: {}]
  %s9 = inlined_call_operand.vmem [shape: f32[2,1], index: 9, kind: output, shape index: {}]
  %s10 = sld [smem:[#allocation0]]
  $region54: #{lstm_forecaster_forward.1} parent=0
    _
  %s12 = ssub.s32 1, %s10
  %s13 = scalar_select 0, %s12, %s10
  %v14 = vstv %s8
  %15 = vst [vmem:[#allocation2] sm:$0x1] %v14
  $region1: #{lstm_forecaster_forward.1} parent=0
    #allocation3 [shape = 'u8[2048]{0}', space=vmem, size = 0x800, scoped, tag = 'input window, operand 1, single buffered']
    #allocation4 [shape = 's32[1]{0}', space=sflag, size = 0x4, scoped, tag = 'scoped memory for lstm_forecaster_forward.1']
    #allocation5 [shape = 'u8[16384]{0}', space=vmem, size = 0x4000, scoped, tag = 'input window, operand 5, single buffered']
    #allocation6 [shape = 's32[1]{0}', space=sflag, size = 0x4, scoped, tag = 'scoped memory for lstm_forecaster_forward.1']
    %16 = vsyncpa [#allocation4], 0
    %17 = vsyncpa [#allocation6], 0
    // Predicated region
    $region2: #{lstm_forecaster_forward.1} parent=1 // pred_check
      _
    $region3: #{lstm_forecaster_forward.1} parent=1 // pred_check_branch
      %19 = sbr.rel (0) target = $region5
    $region4: #{lstm_forecaster_forward.1} parent=1 // pred_region
      _
    $region5: #{lstm_forecaster_forward.1} parent=1 // pred_fallthru
      _
    // Predicated region
    $region6: #{lstm_forecaster_forward.1} parent=1 // pred_check
      _
    $region7: #{lstm_forecaster_forward.1} parent=1 // pred_check_branch
      %21 = sbr.rel (0) target = $region9
    $region8: #{lstm_forecaster_forward.1} parent=1 // pred_region
      %s23 = ssub.s32 64, 64
      %24 = vsyncadd [#allocation4], %s23
      %s26 = sshll.u32 [#allocation3], 4
      %s27 = int_to_ptr.vmem [resolvable:$true] %s26
      %29 = dma.hbm_to_vmem [thread:$0]  %s1, 64, %s27, [#allocation4]
    $region9: #{lstm_forecaster_forward.1} parent=1 // pred_fallthru
      _
    // Predicated region
    $region10: #{lstm_forecaster_forward.1} parent=1 // pred_check
      _
    $region11: #{lstm_forecaster_forward.1} parent=1 // pred_check_branch
      %31 = sbr.rel (0) target = $region13
    $region12: #{lstm_forecaster_forward.1} parent=1 // pred_region
      _
    $region13: #{lstm_forecaster_forward.1} parent=1 // pred_fallthru
      _
    // Predicated region
    $region14: #{lstm_forecaster_forward.1} parent=1 // pred_check
      _
    $region15: #{lstm_forecaster_forward.1} parent=1 // pred_check_branch
      %33 = sbr.rel (0) target = $region17
    $region16: #{lstm_forecaster_forward.1} parent=1 // pred_region
      _
    $region17: #{lstm_forecaster_forward.1} parent=1 // pred_fallthru
      _
    // Predicated region
    $region18: #{lstm_forecaster_forward.1} parent=1 // pred_check
      _
    $region19: #{lstm_forecaster_forward.1} parent=1 // pred_check_branch
      %35 = sbr.rel (0) target = $region21
    $region20: #{lstm_forecaster_forward.1} parent=1 // pred_region
      _
    $region21: #{lstm_forecaster_forward.1} parent=1 // pred_fallthru
      _
    // Predicated region
    $region22: #{lstm_forecaster_forward.1} parent=1 // pred_check
      _
    $region23: #{lstm_forecaster_forward.1} parent=1 // pred_check_branch
      %37 = sbr.rel (0) target = $region25
    $region24: #{lstm_forecaster_forward.1} parent=1 // pred_region
      %s39 = ssub.s32 512, 512
      %40 = vsyncadd [#allocation6], %s39
      %s41 = sshll.u32 [#allocation5], 4
      %s42 = int_to_ptr.vmem [resolvable:$true] %s41
      %47 = dma.hbm_to_vmem [thread:$0]  %s5, 512, %s42, [#allocation6], 128, 128, 8
    $region25: #{lstm_forecaster_forward.1} parent=1 // pred_fallthru
      _
    // Predicated region
    $region26: #{lstm_forecaster_forward.1} parent=1 // pred_check
      _
    $region27: #{lstm_forecaster_forward.1} parent=1 // pred_check_branch
      %49 = sbr.rel (0) target = $region29
    $region28: #{lstm_forecaster_forward.1} parent=1 // pred_region
      _
    $region29: #{lstm_forecaster_forward.1} parent=1 // pred_fallthru
      _
    // Predicated region
    $region30: #{lstm_forecaster_forward.1} parent=1 // pred_check
      _
    $region31: #{lstm_forecaster_forward.1} parent=1 // pred_check_branch
      %51 = sbr.rel (0) target = $region33
    $region32: #{lstm_forecaster_forward.1} parent=1 // pred_region
      _
    $region33: #{lstm_forecaster_forward.1} parent=1 // pred_fallthru
      _
    // Predicated region
    $region34: #{lstm_forecaster_forward.1} parent=1 // pred_check
      _
    $region35: #{lstm_forecaster_forward.1} parent=1 // pred_check_branch
      %53 = sbr.rel (0) target = $region37
    $region36: #{lstm_forecaster_forward.1} parent=1 // pred_region
      _
    $region37: #{lstm_forecaster_forward.1} parent=1 // pred_fallthru
      _
    // Predicated region
    $region38: #{lstm_forecaster_forward.1} parent=1 // pred_check
      _
    $region39: #{lstm_forecaster_forward.1} parent=1 // pred_check_branch
      %55 = sbr.rel (0) target = $region41
    $region40: #{lstm_forecaster_forward.1} parent=1 // pred_region
      %56 = dma.done [#allocation4], 64
    $region41: #{lstm_forecaster_forward.1} parent=1 // pred_fallthru
      _
    // Predicated region
    $region42: #{lstm_forecaster_forward.1} parent=1 // pred_check
      _
    $region43: #{lstm_forecaster_forward.1} parent=1 // pred_check_branch
      %58 = sbr.rel (0) target = $region45
    $region44: #{lstm_forecaster_forward.1} parent=1 // pred_region
      %59 = dma.done [#allocation6], 512
    $region45: #{lstm_forecaster_forward.1} parent=1 // pred_fallthru
      _
    %v60 = vld [vmem:[%s0] sm:$0x1]
    %v61 = vld [vmem:[%s0 + $0x8] sm:$0x1]
    %v62 = vld [vmem:[%s0 + $0x1] sm:$0x1]
    %v63 = vld [vmem:[%s0 + $0x9] sm:$0x1]
    %v64 = vld [vmem:[%s0 + $0x2] sm:$0x1]
    %v65 = vld [vmem:[%s0 + $0xa] sm:$0x1]
    %v66 = vld [vmem:[%s0 + $0x3] sm:$0x1]
    %v67 = vld [vmem:[%s0 + $0xb] sm:$0x1]
    %v68 = vld [vmem:[%s0 + $0x4] sm:$0x1]
    %v69 = vld [vmem:[%s0 + $0xc] sm:$0x1]
    %v70 = vld [vmem:[%s0 + $0x5] sm:$0x1]
    %v71 = vld [vmem:[%s0 + $0xd] sm:$0x1]
    %v72 = vld [vmem:[%s0 + $0x6] sm:$0x1]
    %v73 = vld [vmem:[%s0 + $0xe] sm:$0x1]
    %v74 = vld [vmem:[%s0 + $0x7] sm:$0x1]
    %v75 = vld [vmem:[%s0 + $0xf] sm:$0x1]
    %v78 = vrot.slane %v61, 7
    %vm79 = vcmask 1041409
    %v80 = vsel %vm79, %v78, %v60
    %v84 = vrot.slane %v62, 6
    %v85 = vrot.slane %v63, 5
    %vm86 = vcmask 1043459
    %v87 = vsel %vm86, %v85, %v84
    %v91 = vrot.slane %v64, 4
    %v92 = vrot.slane %v65, 3
    %vm93 = vcmask 1045509
    %v94 = vsel %vm93, %v92, %v91
    %v98 = vrot.slane %v66, 2
    %v99 = vrot.slane %v67, 1
    %vm100 = vcmask 1047559
    %v101 = vsel %vm100, %v99, %v98
    %v105 = vrot.slane %v69, 7
    %v106 = vsel %vm79, %v105, %v68
    %v110 = vrot.slane %v70, 6
    %v111 = vrot.slane %v71, 5
    %v112 = vsel %vm86, %v111, %v110
    %v116 = vrot.slane %v72, 4
    %v117 = vrot.slane %v73, 3
    %v118 = vsel %vm93, %v117, %v116
    %v122 = vrot.slane %v74, 2
    %v123 = vrot.slane %v75, 1
    %v124 = vsel %vm100, %v123, %v122
    %vm126 = vcmask 1041408
    %v127 = vsel %vm126, %v80, %v87
    %vm128 = vcmask 1043456
    %v129 = vsel %vm128, %v127, %v94
    %vm130 = vcmask 1045504
    %v131 = vsel %vm130, %v129, %v101
    %v132 = vsel %vm126, %v106, %v112
    %v133 = vsel %vm128, %v132, %v118
    %v134 = vsel %vm130, %v133, %v124
    %v135 = vld [vmem:[#allocation3] sm:$0xf]
    %v136 = vld [vmem:[%s3] sm:$0x1]
    %v138 = vlaneseq
    %v139 = vshrl.u32 %v138, 7
    %v140 = vsub.s32 0, %v139
    %v141 = vrot.slane %v136, %v140
    %vm143 = vcmask 31744
    %v145 = vsel %vm143, %v131, 0
    %v148 = vsel %vm143, %v134, 0
    %v151 = vsel %vm128, %v135, 0
    %153 = vmatprep.subr.mxu0 0.0
    %154 = vmatpush1.msra.mxu0 %v151
    %155 = vmatprep.subr.mxu0 0.0
    %156 = vmatpush1.msra.mxu0 0.0
    %157 = vmatprep.subr.mxu0 0.0
    %158 = vmatpush1.msra.mxu0 0.0
    %159 = vmatprep.subr.mxu0 0.0
    %160 = vmatpush1.msra.mxu0 0.0
    %161 = vmatprep.subr.mxu0 0.0
    %162 = vmatpush1.msra.mxu0 0.0
    %163 = vmatprep.subr.mxu0 0.0
    %164 = vmatpush1.msra.mxu0 0.0
    %165 = vmatprep.subr.mxu0 0.0
    %166 = vmatpush1.msra.mxu0 0.0
    %167 = vmatprep.subr.mxu0 0.0
    %168 = vmatpush1.msra.mxu0 0.0
    %169 = vmatprep.subr.mxu0 0.0
    %170 = vmatpush1.msra.mxu0 0.0
    %171 = vmatprep.subr.mxu0 0.0
    %172 = vmatpush1.msra.mxu0 0.0
    %173 = vmatprep.subr.mxu0 0.0
    %174 = vmatpush1.msra.mxu0 0.0
    %175 = vmatprep.subr.mxu0 0.0
    %176 = vmatpush1.msra.mxu0 0.0
    %177 = vmatprep.subr.mxu0 0.0
    %178 = vmatpush1.msra.mxu0 0.0
    %179 = vmatprep.subr.mxu0 0.0
    %180 = vmatpush1.msra.mxu0 0.0
    %181 = vmatprep.subr.mxu0 0.0
    %182 = vmatpush1.msra.mxu0 0.0
    %183 = vmatprep.subr.mxu0 0.0
    %184 = vmatpush1.msra.mxu0 0.0
    %185 = vmatprep.subr.mxu0 0.0
    %186 = vmatpush1.msra.mxu0 0.0
    %187 = vmatprep.subr.mxu0 0.0
    %188 = vmatpush1.msra.mxu0 0.0
    %189 = vmatprep.subr.mxu0 0.0
    %190 = vmatpush1.msra.mxu0 0.0
    %191 = vmatprep.subr.mxu0 0.0
    %192 = vmatpush1.msra.mxu0 0.0
    %193 = vmatprep.subr.mxu0 0.0
    %194 = vmatpush1.msra.mxu0 0.0
    %195 = vmatprep.subr.mxu0 0.0
    %196 = vmatpush1.msra.mxu0 0.0
    %197 = vmatprep.subr.mxu0 0.0
    %198 = vmatpush1.msra.mxu0 0.0
    %199 = vmatprep.subr.mxu0 0.0
    %200 = vmatpush1.msra.mxu0 0.0
    %201 = vmatprep.subr.mxu0 0.0
    %202 = vmatpush1.msra.mxu0 0.0
    %203 = vmatprep.subr.mxu0 0.0
    %204 = vmatpush1.msra.mxu0 0.0
    %205 = vmatprep.subr.mxu0 0.0
    %206 = vmatpush1.msra.mxu0 0.0
    %207 = vmatprep.subr.mxu0 0.0
    %208 = vmatpush1.msra.mxu0 0.0
    %209 = vmatprep.subr.mxu0 0.0
    %210 = vmatpush1.msra.mxu0 0.0
    %211 = vmatprep.subr.mxu0 0.0
    %212 = vmatpush1.msra.mxu0 0.0
    %213 = vmatprep.subr.mxu0 0.0
    %214 = vmatpush1.msra.mxu0 0.0
    %215 = vmatprep.subr.mxu0 0.0
    %216 = vmatpush1.msra.mxu0 0.0
    %217 = vmatprep.mubr.f32.mxu0 0.0
    %218 = vmatmul.mubr.f32.gmra.mrb[0].mxu0 %v145
    %v219 = vpop.f32.mrb[0].mxu0
    %v220 = vadd.f32 %v141, %v219
    %v221 = vpop.f32.mrb[0].mxu0
    %222 = vmatprep.mubr.f32.mxu0 0.0
    %223 = vmatmul.mubr.f32.gmra.mrb[0].mxu0 %v148
    %v224 = vpop.f32.mrb[0].mxu0
    %v225 = vadd.f32 %v141, %v224
    %v226 = vpop.f32.mrb[0].mxu0
    %227 = vdwg.mxu0
    %v228 = vld [vmem:[%s2] sm:$0xff]
    %v229 = vld [vmem:[%s2 + $0x8] sm:$0xff]
    %v230 = vld [vmem:[%s2 + $0x10] sm:$0xff]
    %v231 = vld [vmem:[%s2 + $0x18] sm:$0xff]
    %vm232 = vcmask 261120
    %v234 = vsel %vm232, 0.0, 0
    %236 = vmatprep.subr.mxu0 0.0
    %237 = vmatpush1.msra.mxu0 %v228
    %238 = vmatprep.subr.mxu0 0.0
    %239 = vmatpush1.msra.mxu0 %v229
    %240 = vmatprep.subr.mxu0 0.0
    %241 = vmatpush1.msra.mxu0 %v230
    %242 = vmatprep.subr.mxu0 0.0
    %243 = vmatpush1.msra.mxu0 %v231
    %244 = vmatprep.subr.mxu0 0.0
    %245 = vmatpush1.msra.mxu0 0.0
    %246 = vmatprep.subr.mxu0 0.0
    %247 = vmatpush1.msra.mxu0 0.0
    %248 = vmatprep.subr.mxu0 0.0
    %249 = vmatpush1.msra.mxu0 0.0
    %250 = vmatprep.subr.mxu0 0.0
    %251 = vmatpush1.msra.mxu0 0.0
    %252 = vmatprep.subr.mxu0 0.0
    %253 = vmatpush1.msra.mxu0 0.0
    %254 = vmatprep.subr.mxu0 0.0
    %255 = vmatpush1.msra.mxu0 0.0
    %256 = vmatprep.subr.mxu0 0.0
    %257 = vmatpush1.msra.mxu0 0.0
    %258 = vmatprep.subr.mxu0 0.0
    %259 = vmatpush1.msra.mxu0 0.0
    %260 = vmatprep.subr.mxu0 0.0
    %261 = vmatpush1.msra.mxu0 0.0
    %262 = vmatprep.subr.mxu0 0.0
    %263 = vmatpush1.msra.mxu0 0.0
    %264 = vmatprep.subr.mxu0 0.0
    %265 = vmatpush1.msra.mxu0 0.0
    %266 = vmatprep.subr.mxu0 0.0
    %267 = vmatpush1.msra.mxu0 0.0
    %268 = vmatprep.subr.mxu0 0.0
    %269 = vmatpush1.msra.mxu0 0.0
    %270 = vmatprep.subr.mxu0 0.0
    %271 = vmatpush1.msra.mxu0 0.0
    %272 = vmatprep.subr.mxu0 0.0
    %273 = vmatpush1.msra.mxu0 0.0
    %274 = vmatprep.subr.mxu0 0.0
    %275 = vmatpush1.msra.mxu0 0.0
    %276 = vmatprep.subr.mxu0 0.0
    %277 = vmatpush1.msra.mxu0 0.0
    %278 = vmatprep.subr.mxu0 0.0
    %279 = vmatpush1.msra.mxu0 0.0
    %280 = vmatprep.subr.mxu0 0.0
    %281 = vmatpush1.msra.mxu0 0.0
    %282 = vmatprep.subr.mxu0 0.0
    %283 = vmatpush1.msra.mxu0 0.0
    %284 = vmatprep.subr.mxu0 0.0
    %285 = vmatpush1.msra.mxu0 0.0
    %286 = vmatprep.subr.mxu0 0.0
    %287 = vmatpush1.msra.mxu0 0.0
    %288 = vmatprep.subr.mxu0 0.0
    %289 = vmatpush1.msra.mxu0 0.0
    %290 = vmatprep.subr.mxu0 0.0
    %291 = vmatpush1.msra.mxu0 0.0
    %292 = vmatprep.subr.mxu0 0.0
    %293 = vmatpush1.msra.mxu0 0.0
    %294 = vmatprep.subr.mxu0 0.0
    %295 = vmatpush1.msra.mxu0 0.0
    %296 = vmatprep.subr.mxu0 0.0
    %297 = vmatpush1.msra.mxu0 0.0
    %298 = vmatprep.subr.mxu0 0.0
    %299 = vmatpush1.msra.mxu0 0.0
    %300 = vmatprep.mubr.f32.mxu0 0.0
    %301 = vmatmul.mubr.f32.gmra.mrb[0].mxu0 %v234
    %v302 = vpop.f32.mrb[0].mxu0
    %v303 = vadd.f32 0.0, %v302
    %v304 = vpop.f32.mrb[0].mxu0
    %305 = vdwg.mxu0
    %v306 = vadd.f32 %v220, %v303
    %v307 = vxor.u32 %v306, 2147483648
    %v308 = vmul.f32 %v307, 1.442695
    %v309 = vpow.pop %v308
    %v310 = vadd.f32 %v309, 1.0
    %v311 = vrcp.pop %v310
    %v312 = vmul.f32 1.0, %v311
    %v313 = vtanh.pop %v306
    %v314 = vmul.f32 %v312, 0.0
    %316 = vrot.lane.b32.xlu0 %v313, 64
    %v317 = vpop.permute.xlu0 %316
    %v319 = vmul.f32 %v312, %v317
    %321 = vrot.lane.b32.xlu0 %v319, 32
    %v322 = vpop.permute.xlu0 %321
    %v324 = vadd.f32 %v314, %v322
    %v325 = vtanh.pop %v324
    %327 = vrot.lane.b32.xlu0 %v325, 64
    %v328 = vpop.permute.xlu0 %327
    %v330 = vmul.f32 %v312, %v328
    %332 = vrot.lane.b32.xlu0 %v330, 32
    %v333 = vpop.permute.xlu0 %332
    %v334 = vsel %vm232, %v333, 0
    %336 = vmatprep.subr.mxu0 0.0
    %337 = vmatpush1.msra.mxu0 %v228
    %338 = vmatprep.subr.mxu0 0.0
    %339 = vmatpush1.msra.mxu0 %v229
    %340 = vmatprep.subr.mxu0 0.0
    %341 = vmatpush1.msra.mxu0 %v230
    %342 = vmatprep.subr.mxu0 0.0
    %343 = vmatpush1.msra.mxu0 %v231
    %344 = vmatprep.subr.mxu0 0.0
    %345 = vmatpush1.msra.mxu0 0.0
    %346 = vmatprep.subr.mxu0 0.0
    %347 = vmatpush1.msra.mxu0 0.0
    %348 = vmatprep.subr.mxu0 0.0
    %349 = vmatpush1.msra.mxu0 0.0
    %350 = vmatprep.subr.mxu0 0.0
    %351 = vmatpush1.msra.mxu0 0.0
    %352 = vmatprep.subr.mxu0 0.0
    %353 = vmatpush1.msra.mxu0 0.0
    %354 = vmatprep.subr.mxu0 0.0
    %355 = vmatpush1.msra.mxu0 0.0
    %356 = vmatprep.subr.mxu0 0.0
    %357 = vmatpush1.msra.mxu0 0.0
    %358 = vmatprep.subr.mxu0 0.0
    %359 = vmatpush1.msra.mxu0 0.0
    %360 = vmatprep.subr.mxu0 0.0
    %361 = vmatpush1.msra.mxu0 0.0
    %362 = vmatprep.subr.mxu0 0.0
    %363 = vmatpush1.msra.mxu0 0.0
    %364 = vmatprep.subr.mxu0 0.0
    %365 = vmatpush1.msra.mxu0 0.0
    %366 = vmatprep.subr.mxu0 0.0
    %367 = vmatpush1.msra.mxu0 0.0
    %368 = vmatprep.subr.mxu0 0.0
    %369 = vmatpush1.msra.mxu0 0.0
    %370 = vmatprep.subr.mxu0 0.0
    %371 = vmatpush1.msra.mxu0 0.0
    %372 = vmatprep.subr.mxu0 0.0
    %373 = vmatpush1.msra.mxu0 0.0
    %374 = vmatprep.subr.mxu0 0.0
    %375 = vmatpush1.msra.mxu0 0.0
    %376 = vmatprep.subr.mxu0 0.0
    %377 = vmatpush1.msra.mxu0 0.0
    %378 = vmatprep.subr.mxu0 0.0
    %379 = vmatpush1.msra.mxu0 0.0
    %380 = vmatprep.subr.mxu0 0.0
    %381 = vmatpush1.msra.mxu0 0.0
    %382 = vmatprep.subr.mxu0 0.0
    %383 = vmatpush1.msra.mxu0 0.0
    %384 = vmatprep.subr.mxu0 0.0
    %385 = vmatpush1.msra.mxu0 0.0
    %386 = vmatprep.subr.mxu0 0.0
    %387 = vmatpush1.msra.mxu0 0.0
    %388 = vmatprep.subr.mxu0 0.0
    %389 = vmatpush1.msra.mxu0 0.0
    %390 = vmatprep.subr.mxu0 0.0
    %391 = vmatpush1.msra.mxu0 0.0
    %392 = vmatprep.subr.mxu0 0.0
    %393 = vmatpush1.msra.mxu0 0.0
    %394 = vmatprep.subr.mxu0 0.0
    %395 = vmatpush1.msra.mxu0 0.0
    %396 = vmatprep.subr.mxu0 0.0
    %397 = vmatpush1.msra.mxu0 0.0
    %398 = vmatprep.subr.mxu0 0.0
    %399 = vmatpush1.msra.mxu0 0.0
    %400 = vmatprep.mubr.f32.mxu0 0.0
    %401 = vmatmul.mubr.f32.gmra.mrb[0].mxu0 %v334
    %v402 = vpop.f32.mrb[0].mxu0
    %v403 = vadd.f32 0.0, %v402
    %v404 = vpop.f32.mrb[0].mxu0
    %405 = vdwg.mxu0
    %v407 = vrot.slane %v403, 6
    %v409 = vadd.f32 %v220, %v407
    %v410 = vxor.u32 %v409, 2147483648
    %v411 = vmul.f32 %v410, 1.442695
    %v412 = vpow.pop %v411
    %v413 = vadd.f32 %v412, 1.0
    %v414 = vrcp.pop %v413
    %v415 = vmul.f32 1.0, %v414
    %v416 = vtanh.pop %v409
    %v418 = vrot.slane %v324, 6
    %v420 = vmul.f32 %v415, %v418
    %422 = vrot.lane.b32.xlu0 %v416, 64
    %v423 = vpop.permute.xlu0 %422
    %v425 = vmul.f32 %v415, %v423
    %427 = vrot.lane.b32.xlu0 %v425, 32
    %v428 = vpop.permute.xlu0 %427
    %v430 = vadd.f32 %v420, %v428
    %v431 = vtanh.pop %v430
    %433 = vrot.lane.b32.xlu0 %v431, 64
    %v434 = vpop.permute.xlu0 %433
    %v436 = vmul.f32 %v415, %v434
    %v438 = vrot.slane %v436, 2
    %439 = vrot.lane.b32.xlu0 %v438, 32
    %v440 = vpop.permute.xlu0 %439
    %v441 = vsel %vm232, %v440, 0
    %443 = vmatprep.subr.mxu0 0.0
    %444 = vmatpush1.msra.mxu0 %v228
    %445 = vmatprep.subr.mxu0 0.0
    %446 = vmatpush1.msra.mxu0 %v229
    %447 = vmatprep.subr.mxu0 0.0
    %448 = vmatpush1.msra.mxu0 %v230
    %449 = vmatprep.subr.mxu0 0.0
    %450 = vmatpush1.msra.mxu0 %v231
    %451 = vmatprep.subr.mxu0 0.0
    %452 = vmatpush1.msra.mxu0 0.0
    %453 = vmatprep.subr.mxu0 0.0
    %454 = vmatpush1.msra.mxu0 0.0
    %455 = vmatprep.subr.mxu0 0.0
    %456 = vmatpush1.msra.mxu0 0.0
    %457 = vmatprep.subr.mxu0 0.0
    %458 = vmatpush1.msra.mxu0 0.0
    %459 = vmatprep.subr.mxu0 0.0
    %460 = vmatpush1.msra.mxu0 0.0
    %461 = vmatprep.subr.mxu0 0.0
    %462 = vmatpush1.msra.mxu0 0.0
    %463 = vmatprep.subr.mxu0 0.0
    %464 = vmatpush1.msra.mxu0 0.0
    %465 = vmatprep.subr.mxu0 0.0
    %466 = vmatpush1.msra.mxu0 0.0
    %467 = vmatprep.subr.mxu0 0.0
    %468 = vmatpush1.msra.mxu0 0.0
    %469 = vmatprep.subr.mxu0 0.0
    %470 = vmatpush1.msra.mxu0 0.0
    %471 = vmatprep.subr.mxu0 0.0
    %472 = vmatpush1.msra.mxu0 0.0
    %473 = vmatprep.subr.mxu0 0.0
    %474 = vmatpush1.msra.mxu0 0.0
    %475 = vmatprep.subr.mxu0 0.0
    %476 = vmatpush1.msra.mxu0 0.0
    %477 = vmatprep.subr.mxu0 0.0
    %478 = vmatpush1.msra.mxu0 0.0
    %479 = vmatprep.subr.mxu0 0.0
    %480 = vmatpush1.msra.mxu0 0.0
    %481 = vmatprep.subr.mxu0 0.0
    %482 = vmatpush1.msra.mxu0 0.0
    %483 = vmatprep.subr.mxu0 0.0
    %484 = vmatpush1.msra.mxu0 0.0
    %485 = vmatprep.subr.mxu0 0.0
    %486 = vmatpush1.msra.mxu0 0.0
    %487 = vmatprep.subr.mxu0 0.0
    %488 = vmatpush1.msra.mxu0 0.0
    %489 = vmatprep.subr.mxu0 0.0
    %490 = vmatpush1.msra.mxu0 0.0
    %491 = vmatprep.subr.mxu0 0.0
    %492 = vmatpush1.msra.mxu0 0.0
    %493 = vmatprep.subr.mxu0 0.0
    %494 = vmatpush1.msra.mxu0 0.0
    %495 = vmatprep.subr.mxu0 0.0
    %496 = vmatpush1.msra.mxu0 0.0
    %497 = vmatprep.subr.mxu0 0.0
    %498 = vmatpush1.msra.mxu0 0.0
    %499 = vmatprep.subr.mxu0 0.0
    %500 = vmatpush1.msra.mxu0 0.0
    %501 = vmatprep.subr.mxu0 0.0
    %502 = vmatpush1.msra.mxu0 0.0
    %503 = vmatprep.subr.mxu0 0.0
    %504 = vmatpush1.msra.mxu0 0.0
    %505 = vmatprep.subr.mxu0 0.0
    %506 = vmatpush1.msra.mxu0 0.0
    %507 = vmatprep.mubr.f32.mxu0 0.0
    %508 = vmatmul.mubr.f32.gmra.mrb[0].mxu0 %v441
    %v509 = vpop.f32.mrb[0].mxu0
    %v510 = vadd.f32 0.0, %v509
    %v511 = vpop.f32.mrb[0].mxu0
    %512 = vdwg.mxu0
    %v514 = vrot.slane %v510, 4
    %v516 = vadd.f32 %v220, %v514
    %v517 = vxor.u32 %v516, 2147483648
    %v518 = vmul.f32 %v517, 1.442695
    %v519 = vpow.pop %v518
    %v520 = vadd.f32 %v519, 1.0
    %v521 = vrcp.pop %v520
    %v522 = vmul.f32 1.0, %v521
    %v523 = vtanh.pop %v516
    %v525 = vrot.slane %v430, 6
    %v527 = vmul.f32 %v522, %v525
    %529 = vrot.lane.b32.xlu0 %v523, 64
    %v530 = vpop.permute.xlu0 %529
    %v532 = vmul.f32 %v522, %v530
    %534 = vrot.lane.b32.xlu0 %v532, 32
    %v535 = vpop.permute.xlu0 %534
    %v537 = vadd.f32 %v527, %v535
    %v538 = vtanh.pop %v537
    %540 = vrot.lane.b32.xlu0 %v538, 64
    %v541 = vpop.permute.xlu0 %540
    %v543 = vmul.f32 %v522, %v541
    %v545 = vrot.slane %v543, 4
    %546 = vrot.lane.b32.xlu0 %v545, 32
    %v547 = vpop.permute.xlu0 %546
    %v548 = vsel %vm232, %v547, 0
    %550 = vmatprep.subr.mxu0 0.0
    %551 = vmatpush1.msra.mxu0 %v228
    %552 = vmatprep.subr.mxu0 0.0
    %553 = vmatpush1.msra.mxu0 %v229
    %554 = vmatprep.subr.mxu0 0.0
    %555 = vmatpush1.msra.mxu0 %v230
    %556 = vmatprep.subr.mxu0 0.0
    %557 = vmatpush1.msra.mxu0 %v231
    %558 = vmatprep.subr.mxu0 0.0
    %559 = vmatpush1.msra.mxu0 0.0
    %560 = vmatprep.subr.mxu0 0.0
    %561 = vmatpush1.msra.mxu0 0.0
    %562 = vmatprep.subr.mxu0 0.0
    %563 = vmatpush1.msra.mxu0 0.0
    %564 = vmatprep.subr.mxu0 0.0
    %565 = vmatpush1.msra.mxu0 0.0
    %566 = vmatprep.subr.mxu0 0.0
    %567 = vmatpush1.msra.mxu0 0.0
    %568 = vmatprep.subr.mxu0 0.0
    %569 = vmatpush1.msra.mxu0 0.0
    %570 = vmatprep.subr.mxu0 0.0
    %571 = vmatpush1.msra.mxu0 0.0
    %572 = vmatprep.subr.mxu0 0.0
    %573 = vmatpush1.msra.mxu0 0.0
    %574 = vmatprep.subr.mxu0 0.0
    %575 = vmatpush1.msra.mxu0 0.0
    %576 = vmatprep.subr.mxu0 0.0
    %577 = vmatpush1.msra.mxu0 0.0
    %578 = vmatprep.subr.mxu0 0.0
    %579 = vmatpush1.msra.mxu0 0.0
    %580 = vmatprep.subr.mxu0 0.0
    %581 = vmatpush1.msra.mxu0 0.0
    %582 = vmatprep.subr.mxu0 0.0
    %583 = vmatpush1.msra.mxu0 0.0
    %584 = vmatprep.subr.mxu0 0.0
    %585 = vmatpush1.msra.mxu0 0.0
    %586 = vmatprep.subr.mxu0 0.0
    %587 = vmatpush1.msra.mxu0 0.0
    %588 = vmatprep.subr.mxu0 0.0
    %589 = vmatpush1.msra.mxu0 0.0
    %590 = vmatprep.subr.mxu0 0.0
    %591 = vmatpush1.msra.mxu0 0.0
    %592 = vmatprep.subr.mxu0 0.0
    %593 = vmatpush1.msra.mxu0 0.0
    %594 = vmatprep.subr.mxu0 0.0
    %595 = vmatpush1.msra.mxu0 0.0
    %596 = vmatprep.subr.mxu0 0.0
    %597 = vmatpush1.msra.mxu0 0.0
    %598 = vmatprep.subr.mxu0 0.0
    %599 = vmatpush1.msra.mxu0 0.0
    %600 = vmatprep.subr.mxu0 0.0
    %601 = vmatpush1.msra.mxu0 0.0
    %602 = vmatprep.subr.mxu0 0.0
    %603 = vmatpush1.msra.mxu0 0.0
    %604 = vmatprep.subr.mxu0 0.0
    %605 = vmatpush1.msra.mxu0 0.0
    %606 = vmatprep.subr.mxu0 0.0
    %607 = vmatpush1.msra.mxu0 0.0
    %608 = vmatprep.subr.mxu0 0.0
    %609 = vmatpush1.msra.mxu0 0.0
    %610 = vmatprep.subr.mxu0 0.0
    %611 = vmatpush1.msra.mxu0 0.0
    %612 = vmatprep.subr.mxu0 0.0
    %613 = vmatpush1.msra.mxu0 0.0
    %614 = vmatprep.mubr.f32.mxu0 0.0
    %615 = vmatmul.mubr.f32.gmra.mrb[0].mxu0 %v548
    %v616 = vpop.f32.mrb[0].mxu0
    %v617 = vadd.f32 0.0, %v616
    %v618 = vpop.f32.mrb[0].mxu0
    %619 = vdwg.mxu0
    %v621 = vrot.slane %v617, 2
    %v623 = vadd.f32 %v220, %v621
    %v624 = vxor.u32 %v623, 2147483648
    %v625 = vmul.f32 %v624, 1.442695
    %v626 = vpow.pop %v625
    %v627 = vadd.f32 %v626, 1.0
    %v628 = vrcp.pop %v627
    %v629 = vmul.f32 1.0, %v628
    %v630 = vtanh.pop %v623
    %v632 = vrot.slane %v537, 6
    %v634 = vmul.f32 %v629, %v632
    %636 = vrot.lane.b32.xlu0 %v630, 64
    %v637 = vpop.permute.xlu0 %636
    %v639 = vmul.f32 %v629, %v637
    %641 = vrot.lane.b32.xlu0 %v639, 32
    %v642 = vpop.permute.xlu0 %641
    %v644 = vadd.f32 %v634, %v642
    %v645 = vtanh.pop %v644
    %647 = vrot.lane.b32.xlu0 %v645, 64
    %v648 = vpop.permute.xlu0 %647
    %v650 = vmul.f32 %v629, %v648
    %v652 = vrot.slane %v650, 6
    %653 = vrot.lane.b32.xlu0 %v652, 32
    %v654 = vpop.permute.xlu0 %653
    %v655 = vsel %vm232, %v654, 0
    %657 = vmatprep.subr.mxu0 0.0
    %658 = vmatpush1.msra.mxu0 %v228
    %659 = vmatprep.subr.mxu0 0.0
    %660 = vmatpush1.msra.mxu0 %v229
    %661 = vmatprep.subr.mxu0 0.0
    %662 = vmatpush1.msra.mxu0 %v230
    %663 = vmatprep.subr.mxu0 0.0
    %664 = vmatpush1.msra.mxu0 %v231
    %665 = vmatprep.subr.mxu0 0.0
    %666 = vmatpush1.msra.mxu0 0.0
    %667 = vmatprep.subr.mxu0 0.0
    %668 = vmatpush1.msra.mxu0 0.0
    %669 = vmatprep.subr.mxu0 0.0
    %670 = vmatpush1.msra.mxu0 0.0
    %671 = vmatprep.subr.mxu0 0.0
    %672 = vmatpush1.msra.mxu0 0.0
    %673 = vmatprep.subr.mxu0 0.0
    %674 = vmatpush1.msra.mxu0 0.0
    %675 = vmatprep.subr.mxu0 0.0
    %676 = vmatpush1.msra.mxu0 0.0
    %677 = vmatprep.subr.mxu0 0.0
    %678 = vmatpush1.msra.mxu0 0.0
    %679 = vmatprep.subr.mxu0 0.0
    %680 = vmatpush1.msra.mxu0 0.0
    %681 = vmatprep.subr.mxu0 0.0
    %682 = vmatpush1.msra.mxu0 0.0
    %683 = vmatprep.subr.mxu0 0.0
    %684 = vmatpush1.msra.mxu0 0.0
    %685 = vmatprep.subr.mxu0 0.0
    %686 = vmatpush1.msra.mxu0 0.0
    %687 = vmatprep.subr.mxu0 0.0
    %688 = vmatpush1.msra.mxu0 0.0
    %689 = vmatprep.subr.mxu0 0.0
    %690 = vmatpush1.msra.mxu0 0.0
    %691 = vmatprep.subr.mxu0 0.0
    %692 = vmatpush1.msra.mxu0 0.0
    %693 = vmatprep.subr.mxu0 0.0
    %694 = vmatpush1.msra.mxu0 0.0
    %695 = vmatprep.subr.mxu0 0.0
    %696 = vmatpush1.msra.mxu0 0.0
    %697 = vmatprep.subr.mxu0 0.0
    %698 = vmatpush1.msra.mxu0 0.0
    %699 = vmatprep.subr.mxu0 0.0
    %700 = vmatpush1.msra.mxu0 0.0
    %701 = vmatprep.subr.mxu0 0.0
    %702 = vmatpush1.msra.mxu0 0.0
    %703 = vmatprep.subr.mxu0 0.0
    %704 = vmatpush1.msra.mxu0 0.0
    %705 = vmatprep.subr.mxu0 0.0
    %706 = vmatpush1.msra.mxu0 0.0
    %707 = vmatprep.subr.mxu0 0.0
    %708 = vmatpush1.msra.mxu0 0.0
    %709 = vmatprep.subr.mxu0 0.0
    %710 = vmatpush1.msra.mxu0 0.0
    %711 = vmatprep.subr.mxu0 0.0
    %712 = vmatpush1.msra.mxu0 0.0
    %713 = vmatprep.subr.mxu0 0.0
    %714 = vmatpush1.msra.mxu0 0.0
    %715 = vmatprep.subr.mxu0 0.0
    %716 = vmatpush1.msra.mxu0 0.0
    %717 = vmatprep.subr.mxu0 0.0
    %718 = vmatpush1.msra.mxu0 0.0
    %719 = vmatprep.subr.mxu0 0.0
    %720 = vmatpush1.msra.mxu0 0.0
    %721 = vmatprep.mubr.f32.mxu0 0.0
    %722 = vmatmul.mubr.f32.gmra.mrb[0].mxu0 %v655
    %v723 = vpop.f32.mrb[0].mxu0
    %v724 = vadd.f32 0.0, %v723
    %v725 = vpop.f32.mrb[0].mxu0
    %726 = vdwg.mxu0
    %v727 = vadd.f32 %v225, %v724
    %v728 = vxor.u32 %v727, 2147483648
    %v729 = vmul.f32 %v728, 1.442695
    %v730 = vpow.pop %v729
    %v731 = vadd.f32 %v730, 1.0
    %v732 = vrcp.pop %v731
    %v733 = vmul.f32 1.0, %v732
    %v734 = vtanh.pop %v727
    %v736 = vrot.slane %v644, 6
    %v738 = vmul.f32 %v733, %v736
    %740 = vrot.lane.b32.xlu0 %v734, 64
    %v741 = vpop.permute.xlu0 %740
    %v743 = vmul.f32 %v733, %v741
    %745 = vrot.lane.b32.xlu0 %v743, 32
    %v746 = vpop.permute.xlu0 %745
    %v748 = vadd.f32 %v738, %v746
    %v749 = vtanh.pop %v748
    %751 = vrot.lane.b32.xlu0 %v749, 64
    %v752 = vpop.permute.xlu0 %751
    %v754 = vmul.f32 %v733, %v752
    %756 = vrot.lane.b32.xlu0 %v754, 32
    %v757 = vpop.permute.xlu0 %756
    %v758 = vsel %vm232, %v757, 0
    %760 = vmatprep.subr.mxu0 0.0
    %761 = vmatpush1.msra.mxu0 %v228
    %762 = vmatprep.subr.mxu0 0.0
    %763 = vmatpush1.msra.mxu0 %v229
    %764 = vmatprep.subr.mxu0 0.0
    %765 = vmatpush1.msra.mxu0 %v230
    %766 = vmatprep.subr.mxu0 0.0
    %767 = vmatpush1.msra.mxu0 %v231
    %768 = vmatprep.subr.mxu0 0.0
    %769 = vmatpush1.msra.mxu0 0.0
    %770 = vmatprep.subr.mxu0 0.0
    %771 = vmatpush1.msra.mxu0 0.0
    %772 = vmatprep.subr.mxu0 0.0
    %773 = vmatpush1.msra.mxu0 0.0
    %774 = vmatprep.subr.mxu0 0.0
    %775 = vmatpush1.msra.mxu0 0.0
    %776 = vmatprep.subr.mxu0 0.0
    %777 = vmatpush1.msra.mxu0 0.0
    %778 = vmatprep.subr.mxu0 0.0
    %779 = vmatpush1.msra.mxu0 0.0
    %780 = vmatprep.subr.mxu0 0.0
    %781 = vmatpush1.msra.mxu0 0.0
    %782 = vmatprep.subr.mxu0 0.0
    %783 = vmatpush1.msra.mxu0 0.0
    %784 = vmatprep.subr.mxu0 0.0
    %785 = vmatpush1.msra.mxu0 0.0
    %786 = vmatprep.subr.mxu0 0.0
    %787 = vmatpush1.msra.mxu0 0.0
    %788 = vmatprep.subr.mxu0 0.0
    %789 = vmatpush1.msra.mxu0 0.0
    %790 = vmatprep.subr.mxu0 0.0
    %791 = vmatpush1.msra.mxu0 0.0
    %792 = vmatprep.subr.mxu0 0.0
    %793 = vmatpush1.msra.mxu0 0.0
    %794 = vmatprep.subr.mxu0 0.0
    %795 = vmatpush1.msra.mxu0 0.0
    %796 = vmatprep.subr.mxu0 0.0
    %797 = vmatpush1.msra.mxu0 0.0
    %798 = vmatprep.subr.mxu0 0.0
    %799 = vmatpush1.msra.mxu0 0.0
    %800 = vmatprep.subr.mxu0 0.0
    %801 = vmatpush1.msra.mxu0 0.0
    %802 = vmatprep.subr.mxu0 0.0
    %803 = vmatpush1.msra.mxu0 0.0
    %804 = vmatprep.subr.mxu0 0.0
    %805 = vmatpush1.msra.mxu0 0.0
    %806 = vmatprep.subr.mxu0 0.0
    %807 = vmatpush1.msra.mxu0 0.0
    %808 = vmatprep.subr.mxu0 0.0
    %809 = vmatpush1.msra.mxu0 0.0
    %810 = vmatprep.subr.mxu0 0.0
    %811 = vmatpush1.msra.mxu0 0.0
    %812 = vmatprep.subr.mxu0 0.0
    %813 = vmatpush1.msra.mxu0 0.0
    %814 = vmatprep.subr.mxu0 0.0
    %815 = vmatpush1.msra.mxu0 0.0
    %816 = vmatprep.subr.mxu0 0.0
    %817 = vmatpush1.msra.mxu0 0.0
    %818 = vmatprep.subr.mxu0 0.0
    %819 = vmatpush1.msra.mxu0 0.0
    %820 = vmatprep.subr.mxu0 0.0
    %821 = vmatpush1.msra.mxu0 0.0
    %822 = vmatprep.subr.mxu0 0.0
    %823 = vmatpush1.msra.mxu0 0.0
    %824 = vmatprep.mubr.f32.mxu0 0.0
    %825 = vmatmul.mubr.f32.gmra.mrb[0].mxu0 %v758
    %v826 = vpop.f32.mrb[0].mxu0
    %v827 = vadd.f32 0.0, %v826
    %v828 = vpop.f32.mrb[0].mxu0
    %829 = vdwg.mxu0
    %v831 = vrot.slane %v827, 6
    %v833 = vadd.f32 %v225, %v831
    %v834 = vxor.u32 %v833, 2147483648
    %v835 = vmul.f32 %v834, 1.442695
    %v836 = vpow.pop %v835
    %v837 = vadd.f32 %v836, 1.0
    %v838 = vrcp.pop %v837
    %v839 = vmul.f32 1.0, %v838
    %v840 = vtanh.pop %v833
    %v842 = vrot.slane %v748, 6
    %v844 = vmul.f32 %v839, %v842
    %846 = vrot.lane.b32.xlu0 %v840, 64
    %v847 = vpop.permute.xlu0 %846
    %v849 = vmul.f32 %v839, %v847
    %851 = vrot.lane.b32.xlu0 %v849, 32
    %v852 = vpop.permute.xlu0 %851
    %v854 = vadd.f32 %v844, %v852
    %v855 = vtanh.pop %v854
    %857 = vrot.lane.b32.xlu0 %v855, 64
    %v858 = vpop.permute.xlu0 %857
    %v860 = vmul.f32 %v839, %v858
    %v862 = vrot.slane %v860, 2
    %863 = vrot.lane.b32.xlu0 %v862, 32
    %v864 = vpop.permute.xlu0 %863
    %v865 = vsel %vm232, %v864, 0
    %867 = vmatprep.subr.mxu0 0.0
    %868 = vmatpush1.msra.mxu0 %v228
    %869 = vmatprep.subr.mxu0 0.0
    %870 = vmatpush1.msra.mxu0 %v229
    %871 = vmatprep.subr.mxu0 0.0
    %872 = vmatpush1.msra.mxu0 %v230
    %873 = vmatprep.subr.mxu0 0.0
    %874 = vmatpush1.msra.mxu0 %v231
    %875 = vmatprep.subr.mxu0 0.0
    %876 = vmatpush1.msra.mxu0 0.0
    %877 = vmatprep.subr.mxu0 0.0
    %878 = vmatpush1.msra.mxu0 0.0
    %879 = vmatprep.subr.mxu0 0.0
    %880 = vmatpush1.msra.mxu0 0.0
    %881 = vmatprep.subr.mxu0 0.0
    %882 = vmatpush1.msra.mxu0 0.0
    %883 = vmatprep.subr.mxu0 0.0
    %884 = vmatpush1.msra.mxu0 0.0
    %885 = vmatprep.subr.mxu0 0.0
    %886 = vmatpush1.msra.mxu0 0.0
    %887 = vmatprep.subr.mxu0 0.0
    %888 = vmatpush1.msra.mxu0 0.0
    %889 = vmatprep.subr.mxu0 0.0
    %890 = vmatpush1.msra.mxu0 0.0
    %891 = vmatprep.subr.mxu0 0.0
    %892 = vmatpush1.msra.mxu0 0.0
    %893 = vmatprep.subr.mxu0 0.0
    %894 = vmatpush1.msra.mxu0 0.0
    %895 = vmatprep.subr.mxu0 0.0
    %896 = vmatpush1.msra.mxu0 0.0
    %897 = vmatprep.subr.mxu0 0.0
    %898 = vmatpush1.msra.mxu0 0.0
    %899 = vmatprep.subr.mxu0 0.0
    %900 = vmatpush1.msra.mxu0 0.0
    %901 = vmatprep.subr.mxu0 0.0
    %902 = vmatpush1.msra.mxu0 0.0
    %903 = vmatprep.subr.mxu0 0.0
    %904 = vmatpush1.msra.mxu0 0.0
    %905 = vmatprep.subr.mxu0 0.0
    %906 = vmatpush1.msra.mxu0 0.0
    %907 = vmatprep.subr.mxu0 0.0
    %908 = vmatpush1.msra.mxu0 0.0
    %909 = vmatprep.subr.mxu0 0.0
    %910 = vmatpush1.msra.mxu0 0.0
    %911 = vmatprep.subr.mxu0 0.0
    %912 = vmatpush1.msra.mxu0 0.0
    %913 = vmatprep.subr.mxu0 0.0
    %914 = vmatpush1.msra.mxu0 0.0
    %915 = vmatprep.subr.mxu0 0.0
    %916 = vmatpush1.msra.mxu0 0.0
    %917 = vmatprep.subr.mxu0 0.0
    %918 = vmatpush1.msra.mxu0 0.0
    %919 = vmatprep.subr.mxu0 0.0
    %920 = vmatpush1.msra.mxu0 0.0
    %921 = vmatprep.subr.mxu0 0.0
    %922 = vmatpush1.msra.mxu0 0.0
    %923 = vmatprep.subr.mxu0 0.0
    %924 = vmatpush1.msra.mxu0 0.0
    %925 = vmatprep.subr.mxu0 0.0
    %926 = vmatpush1.msra.mxu0 0.0
    %927 = vmatprep.subr.mxu0 0.0
    %928 = vmatpush1.msra.mxu0 0.0
    %929 = vmatprep.subr.mxu0 0.0
    %930 = vmatpush1.msra.mxu0 0.0
    %931 = vmatprep.mubr.f32.mxu0 0.0
    %932 = vmatmul.mubr.f32.gmra.mrb[0].mxu0 %v865
    %v933 = vpop.f32.mrb[0].mxu0
    %v934 = vadd.f32 0.0, %v933
    %v935 = vpop.f32.mrb[0].mxu0
    %936 = vdwg.mxu0
    %v938 = vrot.slane %v934, 4
    %v940 = vadd.f32 %v225, %v938
    %v941 = vxor.u32 %v940, 2147483648
    %v942 = vmul.f32 %v941, 1.442695
    %v943 = vpow.pop %v942
    %v944 = vadd.f32 %v943, 1.0
    %v945 = vrcp.pop %v944
    %v946 = vmul.f32 1.0, %v945
    %v947 = vtanh.pop %v940
    %v949 = vrot.slane %v854, 6
    %v951 = vmul.f32 %v946, %v949
    %953 = vrot.lane.b32.xlu0 %v947, 64
    %v954 = vpop.permute.xlu0 %953
    %v956 = vmul.f32 %v946, %v954
    %958 = vrot.lane.b32.xlu0 %v956, 32
    %v959 = vpop.permute.xlu0 %958
    %v961 = vadd.f32 %v951, %v959
    %v962 = vtanh.pop %v961
    %964 = vrot.lane.b32.xlu0 %v962, 64
    %v965 = vpop.permute.xlu0 %964
    %v967 = vmul.f32 %v946, %v965
    %v969 = vrot.slane %v967, 4
    %970 = vrot.lane.b32.xlu0 %v969, 32
    %v971 = vpop.permute.xlu0 %970
    %v972 = vsel %vm232, %v971, 0
    %974 = vmatprep.subr.mxu0 0.0
    %975 = vmatpush1.msra.mxu0 %v228
    %976 = vmatprep.subr.mxu0 0.0
    %977 = vmatpush1.msra.mxu0 %v229
    %978 = vmatprep.subr.mxu0 0.0
    %979 = vmatpush1.msra.mxu0 %v230
    %980 = vmatprep.subr.mxu0 0.0
    %981 = vmatpush1.msra.mxu0 %v231
    %982 = vmatprep.subr.mxu0 0.0
    %983 = vmatpush1.msra.mxu0 0.0
    %984 = vmatprep.subr.mxu0 0.0
    %985 = vmatpush1.msra.mxu0 0.0
    %986 = vmatprep.subr.mxu0 0.0
    %987 = vmatpush1.msra.mxu0 0.0
    %988 = vmatprep.subr.mxu0 0.0
    %989 = vmatpush1.msra.mxu0 0.0
    %990 = vmatprep.subr.mxu0 0.0
    %991 = vmatpush1.msra.mxu0 0.0
    %992 = vmatprep.subr.mxu0 0.0
    %993 = vmatpush1.msra.mxu0 0.0
    %994 = vmatprep.subr.mxu0 0.0
    %995 = vmatpush1.msra.mxu0 0.0
    %996 = vmatprep.subr.mxu0 0.0
    %997 = vmatpush1.msra.mxu0 0.0
    %998 = vmatprep.subr.mxu0 0.0
    %999 = vmatpush1.msra.mxu0 0.0
    %1000 = vmatprep.subr.mxu0 0.0
    %1001 = vmatpush1.msra.mxu0 0.0
    %1002 = vmatprep.subr.mxu0 0.0
    %1003 = vmatpush1.msra.mxu0 0.0
    %1004 = vmatprep.subr.mxu0 0.0
    %1005 = vmatpush1.msra.mxu0 0.0
    %1006 = vmatprep.subr.mxu0 0.0
    %1007 = vmatpush1.msra.mxu0 0.0
    %1008 = vmatprep.subr.mxu0 0.0
    %1009 = vmatpush1.msra.mxu0 0.0
    %1010 = vmatprep.subr.mxu0 0.0
    %1011 = vmatpush1.msra.mxu0 0.0
    %1012 = vmatprep.subr.mxu0 0.0
    %1013 = vmatpush1.msra.mxu0 0.0
    %1014 = vmatprep.subr.mxu0 0.0
    %1015 = vmatpush1.msra.mxu0 0.0
    %1016 = vmatprep.subr.mxu0 0.0
    %1017 = vmatpush1.msra.mxu0 0.0
    %1018 = vmatprep.subr.mxu0 0.0
    %1019 = vmatpush1.msra.mxu0 0.0
    %1020 = vmatprep.subr.mxu0 0.0
    %1021 = vmatpush1.msra.mxu0 0.0
    %1022 = vmatprep.subr.mxu0 0.0
    %1023 = vmatpush1.msra.mxu0 0.0
    %1024 = vmatprep.subr.mxu0 0.0
    %1025 = vmatpush1.msra.mxu0 0.0
    %1026 = vmatprep.subr.mxu0 0.0
    %1027 = vmatpush1.msra.mxu0 0.0
    %1028 = vmatprep.subr.mxu0 0.0
    %1029 = vmatpush1.msra.mxu0 0.0
    %1030 = vmatprep.subr.mxu0 0.0
    %1031 = vmatpush1.msra.mxu0 0.0
    %1032 = vmatprep.subr.mxu0 0.0
    %1033 = vmatpush1.msra.mxu0 0.0
    %1034 = vmatprep.subr.mxu0 0.0
    %1035 = vmatpush1.msra.mxu0 0.0
    %1036 = vmatprep.subr.mxu0 0.0
    %1037 = vmatpush1.msra.mxu0 0.0
    %1038 = vmatprep.mubr.f32.mxu0 0.0
    %1039 = vmatmul.mubr.f32.gmra.mrb[0].mxu0 %v972
    %v1040 = vpop.f32.mrb[0].mxu0
    %v1041 = vadd.f32 0.0, %v1040
    %v1042 = vpop.f32.mrb[0].mxu0
    %1043 = vdwg.mxu0
    %v1045 = vrot.slane %v1041, 2
    %v1047 = vadd.f32 %v225, %v1045
    %v1048 = vxor.u32 %v1047, 2147483648
    %v1049 = vmul.f32 %v1048, 1.442695
    %v1050 = vpow.pop %v1049
    %v1051 = vadd.f32 %v1050, 1.0
    %v1052 = vrcp.pop %v1051
    %v1053 = vmul.f32 1.0, %v1052
    %v1054 = vtanh.pop %v1047
    %v1056 = vrot.slane %v961, 6
    %v1058 = vmul.f32 %v1053, %v1056
    %1060 = vrot.lane.b32.xlu0 %v1054, 64
    %v1061 = vpop.permute.xlu0 %1060
    %v1063 = vmul.f32 %v1053, %v1061
    %1065 = vrot.lane.b32.xlu0 %v1063, 32
    %v1066 = vpop.permute.xlu0 %1065
    %v1068 = vadd.f32 %v1058, %v1066
    %v1069 = vtanh.pop %v1068
    %1071 = vrot.lane.b32.xlu0 %v1069, 64
    %v1072 = vpop.permute.xlu0 %1071
    %v1074 = vmul.f32 %v1053, %v1072
    %v1075 = vsel %vm126, %v330, %v436
    %v1076 = vsel %vm128, %v1075, %v543
    %v1077 = vsel %vm130, %v1076, %v650
    %v1078 = vsel %vm126, %v754, %v860
    %v1079 = vsel %vm128, %v1078, %v967
    %v1080 = vsel %vm130, %v1079, %v1074
    %v1081 = vld [vmem:[%s4] sm:$0xff]
    %v1082 = vld [vmem:[%s4 + $0x8] sm:$0xff]
    %v1083 = vld [vmem:[%s4 + $0x10] sm:$0xff]
    %v1084 = vld [vmem:[%s4 + $0x18] sm:$0xff]
    %v1085 = vld [vmem:[%s6] sm:$0x1]
    %v1087 = vlaneseq
    %v1088 = vshrl.u32 %v1087, 7
    %v1089 = vsub.s32 0, %v1088
    %v1090 = vrot.slane %v1085, %v1089
    %1094 = vrot.lane.b32.xlu0 %v1077, 32
    %v1095 = vpop.permute.xlu0 %1094
    %1096 = vrot.lane.b32.xlu0 %v1080, 32
    %v1097 = vpop.permute.xlu0 %1096
    %v1098 = vsel %vm232, %v1095, 0
    %v1100 = vsel %vm232, %v1097, 0
    %1102 = vmatprep.subr.mxu0 0.0
    %1103 = vmatpush1.msra.mxu0 %v1081
    %1104 = vmatprep.subr.mxu0 0.0
    %1105 = vmatpush1.msra.mxu0 %v1082
    %1106 = vmatprep.subr.mxu0 0.0
    %1107 = vmatpush1.msra.mxu0 %v1083
    %1108 = vmatprep.subr.mxu0 0.0
    %1109 = vmatpush1.msra.mxu0 %v1084
    %1110 = vmatprep.subr.mxu0 0.0
    %1111 = vmatpush1.msra.mxu0 0.0
    %1112 = vmatprep.subr.mxu0 0.0
    %1113 = vmatpush1.msra.mxu0 0.0
    %1114 = vmatprep.subr.mxu0 0.0
    %1115 = vmatpush1.msra.mxu0 0.0
    %1116 = vmatprep.subr.mxu0 0.0
    %1117 = vmatpush1.msra.mxu0 0.0
    %1118 = vmatprep.subr.mxu0 0.0
    %1119 = vmatpush1.msra.mxu0 0.0
    %1120 = vmatprep.subr.mxu0 0.0
    %1121 = vmatpush1.msra.mxu0 0.0
    %1122 = vmatprep.subr.mxu0 0.0
    %1123 = vmatpush1.msra.mxu0 0.0
    %1124 = vmatprep.subr.mxu0 0.0
    %1125 = vmatpush1.msra.mxu0 0.0
    %1126 = vmatprep.subr.mxu0 0.0
    %1127 = vmatpush1.msra.mxu0 0.0
    %1128 = vmatprep.subr.mxu0 0.0
    %1129 = vmatpush1.msra.mxu0 0.0
    %1130 = vmatprep.subr.mxu0 0.0
    %1131 = vmatpush1.msra.mxu0 0.0
    %1132 = vmatprep.subr.mxu0 0.0
    %1133 = vmatpush1.msra.mxu0 0.0
    %1134 = vmatprep.subr.mxu0 0.0
    %1135 = vmatpush1.msra.mxu0 0.0
    %1136 = vmatprep.subr.mxu0 0.0
    %1137 = vmatpush1.msra.mxu0 0.0
    %1138 = vmatprep.subr.mxu0 0.0
    %1139 = vmatpush1.msra.mxu0 0.0
    %1140 = vmatprep.subr.mxu0 0.0
    %1141 = vmatpush1.msra.mxu0 0.0
    %1142 = vmatprep.subr.mxu0 0.0
    %1143 = vmatpush1.msra.mxu0 0.0
    %1144 = vmatprep.subr.mxu0 0.0
    %1145 = vmatpush1.msra.mxu0 0.0
    %1146 = vmatprep.subr.mxu0 0.0
    %1147 = vmatpush1.msra.mxu0 0.0
    %1148 = vmatprep.subr.mxu0 0.0
    %1149 = vmatpush1.msra.mxu0 0.0
    %1150 = vmatprep.subr.mxu0 0.0
    %1151 = vmatpush1.msra.mxu0 0.0
    %1152 = vmatprep.subr.mxu0 0.0
    %1153 = vmatpush1.msra.mxu0 0.0
    %1154 = vmatprep.subr.mxu0 0.0
    %1155 = vmatpush1.msra.mxu0 0.0
    %1156 = vmatprep.subr.mxu0 0.0
    %1157 = vmatpush1.msra.mxu0 0.0
    %1158 = vmatprep.subr.mxu0 0.0
    %1159 = vmatpush1.msra.mxu0 0.0
    %1160 = vmatprep.subr.mxu0 0.0
    %1161 = vmatpush1.msra.mxu0 0.0
    %1162 = vmatprep.subr.mxu0 0.0
    %1163 = vmatpush1.msra.mxu0 0.0
    %1164 = vmatprep.subr.mxu0 0.0
    %1165 = vmatpush1.msra.mxu0 0.0
    %1166 = vmatprep.mubr.f32.mxu0 0.0
    %1167 = vmatmul.mubr.f32.gmra.mrb[0].mxu0 %v1098
    %v1168 = vpop.f32.mrb[0].mxu0
    %v1169 = vadd.f32 %v1090, %v1168
    %v1170 = vpop.f32.mrb[0].mxu0
    %1171 = vmatprep.mubr.f32.mxu0 0.0
    %1172 = vmatmul.mubr.f32.gmra.mrb[0].mxu0 %v1100
    %v1173 = vpop.f32.mrb[0].mxu0
    %v1174 = vadd.f32 %v1090, %v1173
    %v1175 = vpop.f32.mrb[0].mxu0
    %1176 = vdwg.mxu0
    %v1177 = vld [vmem:[#allocation5] sm:$0xff]
    %v1178 = vld [vmem:[#allocation5 + $0x8] sm:$0xff]
    %v1179 = vld [vmem:[#allocation5 + $0x10] sm:$0xff]
    %v1180 = vld [vmem:[#allocation5 + $0x18] sm:$0xff]
    %1181 = vmatprep.subr.mxu0 0.0
    %1182 = vmatpush1.msra.mxu0 %v1177
    %1183 = vmatprep.subr.mxu0 0.0
    %1184 = vmatpush1.msra.mxu0 %v1178
    %1185 = vmatprep.subr.mxu0 0.0
    %1186 = vmatpush1.msra.mxu0 %v1179
    %1187 = vmatprep.subr.mxu0 0.0
    %1188 = vmatpush1.msra.mxu0 %v1180
    %1189 = vmatprep.subr.mxu0 0.0
    %1190 = vmatpush1.msra.mxu0 0.0
    %1191 = vmatprep.subr.mxu0 0.0
    %1192 = vmatpush1.msra.mxu0 0.0
    %1193 = vmatprep.subr.mxu0 0.0
    %1194 = vmatpush1.msra.mxu0 0.0
    %1195 = vmatprep.subr.mxu0 0.0
    %1196 = vmatpush1.msra.mxu0 0.0
    %1197 = vmatprep.subr.mxu0 0.0
    %1198 = vmatpush1.msra.mxu0 0.0
    %1199 = vmatprep.subr.mxu0 0.0
    %1200 = vmatpush1.msra.mxu0 0.0
    %1201 = vmatprep.subr.mxu0 0.0
    %1202 = vmatpush1.msra.mxu0 0.0
    %1203 = vmatprep.subr.mxu0 0.0
    %1204 = vmatpush1.msra.mxu0 0.0
    %1205 = vmatprep.subr.mxu0 0.0
    %1206 = vmatpush1.msra.mxu0 0.0
    %1207 = vmatprep.subr.mxu0 0.0
    %1208 = vmatpush1.msra.mxu0 0.0
    %1209 = vmatprep.subr.mxu0 0.0
    %1210 = vmatpush1.msra.mxu0 0.0
    %1211 = vmatprep.subr.mxu0 0.0
    %1212 = vmatpush1.msra.mxu0 0.0
    %1213 = vmatprep.subr.mxu0 0.0
    %1214 = vmatpush1.msra.mxu0 0.0
    %1215 = vmatprep.subr.mxu0 0.0
    %1216 = vmatpush1.msra.mxu0 0.0
    %1217 = vmatprep.subr.mxu0 0.0
    %1218 = vmatpush1.msra.mxu0 0.0
    %1219 = vmatprep.subr.mxu0 0.0
    %1220 = vmatpush1.msra.mxu0 0.0
    %1221 = vmatprep.subr.mxu0 0.0
    %1222 = vmatpush1.msra.mxu0 0.0
    %1223 = vmatprep.subr.mxu0 0.0
    %1224 = vmatpush1.msra.mxu0 0.0
    %1225 = vmatprep.subr.mxu0 0.0
    %1226 = vmatpush1.msra.mxu0 0.0
    %1227 = vmatprep.subr.mxu0 0.0
    %1228 = vmatpush1.msra.mxu0 0.0
    %1229 = vmatprep.subr.mxu0 0.0
    %1230 = vmatpush1.msra.mxu0 0.0
    %1231 = vmatprep.subr.mxu0 0.0
    %1232 = vmatpush1.msra.mxu0 0.0
    %1233 = vmatprep.subr.mxu0 0.0
    %1234 = vmatpush1.msra.mxu0 0.0
    %1235 = vmatprep.subr.mxu0 0.0
    %1236 = vmatpush1.msra.mxu0 0.0
    %1237 = vmatprep.subr.mxu0 0.0
    %1238 = vmatpush1.msra.mxu0 0.0
    %1239 = vmatprep.subr.mxu0 0.0
    %1240 = vmatpush1.msra.mxu0 0.0
    %1241 = vmatprep.subr.mxu0 0.0
    %1242 = vmatpush1.msra.mxu0 0.0
    %1243 = vmatprep.subr.mxu0 0.0
    %1244 = vmatpush1.msra.mxu0 0.0
    %1245 = vmatprep.mubr.f32.mxu0 0.0
    %1246 = vmatmul.mubr.f32.gmra.mrb[0].mxu0 %v234
    %v1247 = vpop.f32.mrb[0].mxu0
    %v1248 = vadd.f32 0.0, %v1247
    %v1249 = vpop.f32.mrb[0].mxu0
    %1250 = vdwg.mxu0
    %v1251 = vadd.f32 %v1169, %v1248
    %v1252 = vxor.u32 %v1251, 2147483648
    %v1253 = vmul.f32 %v1252, 1.442695
    %v1254 = vpow.pop %v1253
    %v1255 = vadd.f32 %v1254, 1.0
    %v1256 = vrcp.pop %v1255
    %v1257 = vmul.f32 1.0, %v1256
    %v1258 = vtanh.pop %v1251
    %v1259 = vmul.f32 %v1257, 0.0
    %1261 = vrot.lane.b32.xlu0 %v1258, 64
    %v1262 = vpop.permute.xlu0 %1261
    %v1264 = vmul.f32 %v1257, %v1262
    %1266 = vrot.lane.b32.xlu0 %v1264, 32
    %v1267 = vpop.permute.xlu0 %1266
    %v1269 = vadd.f32 %v1259, %v1267
    %v1270 = vtanh.pop %v1269
    %1272 = vrot.lane.b32.xlu0 %v1270, 64
    %v1273 = vpop.permute.xlu0 %1272
    %v1275 = vmul.f32 %v1257, %v1273
    %1277 = vrot.lane.b32.xlu0 %v1275, 32
    %v1278 = vpop.permute.xlu0 %1277
    %v1279 = vsel %vm232, %v1278, 0
    %1281 = vmatprep.subr.mxu0 0.0
    %1282 = vmatpush1.msra.mxu0 %v1177
    %1283 = vmatprep.subr.mxu0 0.0
    %1284 = vmatpush1.msra.mxu0 %v1178
    %1285 = vmatprep.subr.mxu0 0.0
    %1286 = vmatpush1.msra.mxu0 %v1179
    %1287 = vmatprep.subr.mxu0 0.0
    %1288 = vmatpush1.msra.mxu0 %v1180
    %1289 = vmatprep.subr.mxu0 0.0
    %1290 = vmatpush1.msra.mxu0 0.0
    %1291 = vmatprep.subr.mxu0 0.0
    %1292 = vmatpush1.msra.mxu0 0.0
    %1293 = vmatprep.subr.mxu0 0.0
    %1294 = vmatpush1.msra.mxu0 0.0
    %1295 = vmatprep.subr.mxu0 0.0
    %1296 = vmatpush1.msra.mxu0 0.0
    %1297 = vmatprep.subr.mxu0 0.0
    %1298 = vmatpush1.msra.mxu0 0.0
    %1299 = vmatprep.subr.mxu0 0.0
    %1300 = vmatpush1.msra.mxu0 0.0
    %1301 = vmatprep.subr.mxu0 0.0
    %1302 = vmatpush1.msra.mxu0 0.0
    %1303 = vmatprep.subr.mxu0 0.0
    %1304 = vmatpush1.msra.mxu0 0.0
    %1305 = vmatprep.subr.mxu0 0.0
    %1306 = vmatpush1.msra.mxu0 0.0
    %1307 = vmatprep.subr.mxu0 0.0
    %1308 = vmatpush1.msra.mxu0 0.0
    %1309 = vmatprep.subr.mxu0 0.0
    %1310 = vmatpush1.msra.mxu0 0.0
    %1311 = vmatprep.subr.mxu0 0.0
    %1312 = vmatpush1.msra.mxu0 0.0
    %1313 = vmatprep.subr.mxu0 0.0
    %1314 = vmatpush1.msra.mxu0 0.0
    %1315 = vmatprep.subr.mxu0 0.0
    %1316 = vmatpush1.msra.mxu0 0.0
    %1317 = vmatprep.subr.mxu0 0.0
    %1318 = vmatpush1.msra.mxu0 0.0
    %1319 = vmatprep.subr.mxu0 0.0
    %1320 = vmatpush1.msra.mxu0 0.0
    %1321 = vmatprep.subr.mxu0 0.0
    %1322 = vmatpush1.msra.mxu0 0.0
    %1323 = vmatprep.subr.mxu0 0.0
    %1324 = vmatpush1.msra.mxu0 0.0
    %1325 = vmatprep.subr.mxu0 0.0
    %1326 = vmatpush1.msra.mxu0 0.0
    %1327 = vmatprep.subr.mxu0 0.0
    %1328 = vmatpush1.msra.mxu0 0.0
    %1329 = vmatprep.subr.mxu0 0.0
    %1330 = vmatpush1.msra.mxu0 0.0
    %1331 = vmatprep.subr.mxu0 0.0
    %1332 = vmatpush1.msra.mxu0 0.0
    %1333 = vmatprep.subr.mxu0 0.0
    %1334 = vmatpush1.msra.mxu0 0.0
    %1335 = vmatprep.subr.mxu0 0.0
    %1336 = vmatpush1.msra.mxu0 0.0
    %1337 = vmatprep.subr.mxu0 0.0
    %1338 = vmatpush1.msra.mxu0 0.0
    %1339 = vmatprep.subr.mxu0 0.0
    %1340 = vmatpush1.msra.mxu0 0.0
    %1341 = vmatprep.subr.mxu0 0.0
    %1342 = vmatpush1.msra.mxu0 0.0
    %1343 = vmatprep.subr.mxu0 0.0
    %1344 = vmatpush1.msra.mxu0 0.0
    %1345 = vmatprep.mubr.f32.mxu0 0.0
    %1346 = vmatmul.mubr.f32.gmra.mrb[0].mxu0 %v1279
    %v1347 = vpop.f32.mrb[0].mxu0
    %v1348 = vadd.f32 0.0, %v1347
    %v1349 = vpop.f32.mrb[0].mxu0
    %1350 = vdwg.mxu0
    %v1352 = vrot.slane %v1348, 6
    %v1354 = vadd.f32 %v1169, %v1352
    %v1355 = vxor.u32 %v1354, 2147483648
    %v1356 = vmul.f32 %v1355, 1.442695
    %v1357 = vpow.pop %v1356
    %v1358 = vadd.f32 %v1357, 1.0
    %v1359 = vrcp.pop %v1358
    %v1360 = vmul.f32 1.0, %v1359
    %v1361 = vtanh.pop %v1354
    %v1363 = vrot.slane %v1269, 6
    %v1365 = vmul.f32 %v1360, %v1363
    %1367 = vrot.lane.b32.xlu0 %v1361, 64
    %v1368 = vpop.permute.xlu0 %1367
    %v1370 = vmul.f32 %v1360, %v1368
    %1372 = vrot.lane.b32.xlu0 %v1370, 32
    %v1373 = vpop.permute.xlu0 %1372
    %v1375 = vadd.f32 %v1365, %v1373
    %v1376 = vtanh.pop %v1375
    %1378 = vrot.lane.b32.xlu0 %v1376, 64
    %v1379 = vpop.permute.xlu0 %1378
    %v1381 = vmul.f32 %v1360, %v1379
    %v1383 = vrot.slane %v1381, 2
    %1384 = vrot.lane.b32.xlu0 %v1383, 32
    %v1385 = vpop.permute.xlu0 %1384
    %v1386 = vsel %vm232, %v1385, 0
    %1388 = vmatprep.subr.mxu0 0.0
    %1389 = vmatpush1.msra.mxu0 %v1177
    %1390 = vmatprep.subr.mxu0 0.0
    %1391 = vmatpush1.msra.mxu0 %v1178
    %1392 = vmatprep.subr.mxu0 0.0
    %1393 = vmatpush1.msra.mxu0 %v1179
    %1394 = vmatprep.subr.mxu0 0.0
    %1395 = vmatpush1.msra.mxu0 %v1180
    %1396 = vmatprep.subr.mxu0 0.0
    %1397 = vmatpush1.msra.mxu0 0.0
    %1398 = vmatprep.subr.mxu0 0.0
    %1399 = vmatpush1.msra.mxu0 0.0
    %1400 = vmatprep.subr.mxu0 0.0
    %1401 = vmatpush1.msra.mxu0 0.0
    %1402 = vmatprep.subr.mxu0 0.0
    %1403 = vmatpush1.msra.mxu0 0.0
    %1404 = vmatprep.subr.mxu0 0.0
    %1405 = vmatpush1.msra.mxu0 0.0
    %1406 = vmatprep.subr.mxu0 0.0
    %1407 = vmatpush1.msra.mxu0 0.0
    %1408 = vmatprep.subr.mxu0 0.0
    %1409 = vmatpush1.msra.mxu0 0.0
    %1410 = vmatprep.subr.mxu0 0.0
    %1411 = vmatpush1.msra.mxu0 0.0
    %1412 = vmatprep.subr.mxu0 0.0
    %1413 = vmatpush1.msra.mxu0 0.0
    %1414 = vmatprep.subr.mxu0 0.0
    %1415 = vmatpush1.msra.mxu0 0.0
    %1416 = vmatprep.subr.mxu0 0.0
    %1417 = vmatpush1.msra.mxu0 0.0
    %1418 = vmatprep.subr.mxu0 0.0
    %1419 = vmatpush1.msra.mxu0 0.0
    %1420 = vmatprep.subr.mxu0 0.0
    %1421 = vmatpush1.msra.mxu0 0.0
    %1422 = vmatprep.subr.mxu0 0.0
    %1423 = vmatpush1.msra.mxu0 0.0
    %1424 = vmatprep.subr.mxu0 0.0
    %1425 = vmatpush1.msra.mxu0 0.0
    %1426 = vmatprep.subr.mxu0 0.0
    %1427 = vmatpush1.msra.mxu0 0.0
    %1428 = vmatprep.subr.mxu0 0.0
    %1429 = vmatpush1.msra.mxu0 0.0
    %1430 = vmatprep.subr.mxu0 0.0
    %1431 = vmatpush1.msra.mxu0 0.0
    %1432 = vmatprep.subr.mxu0 0.0
    %1433 = vmatpush1.msra.mxu0 0.0
    %1434 = vmatprep.subr.mxu0 0.0
    %1435 = vmatpush1.msra.mxu0 0.0
    %1436 = vmatprep.subr.mxu0 0.0
    %1437 = vmatpush1.msra.mxu0 0.0
    %1438 = vmatprep.subr.mxu0 0.0
    %1439 = vmatpush1.msra.mxu0 0.0
    %1440 = vmatprep.subr.mxu0 0.0
    %1441 = vmatpush1.msra.mxu0 0.0
    %1442 = vmatprep.subr.mxu0 0.0
    %1443 = vmatpush1.msra.mxu0 0.0
    %1444 = vmatprep.subr.mxu0 0.0
    %1445 = vmatpush1.msra.mxu0 0.0
    %1446 = vmatprep.subr.mxu0 0.0
    %1447 = vmatpush1.msra.mxu0 0.0
    %1448 = vmatprep.subr.mxu0 0.0
    %1449 = vmatpush1.msra.mxu0 0.0
    %1450 = vmatprep.subr.mxu0 0.0
    %1451 = vmatpush1.msra.mxu0 0.0
    %1452 = vmatprep.mubr.f32.mxu0 0.0
    %1453 = vmatmul.mubr.f32.gmra.mrb[0].mxu0 %v1386
    %v1454 = vpop.f32.mrb[0].mxu0
    %v1455 = vadd.f32 0.0, %v1454
    %v1456 = vpop.f32.mrb[0].mxu0
    %1457 = vdwg.mxu0
    %v1459 = vrot.slane %v1455, 4
    %v1461 = vadd.f32 %v1169, %v1459
    %v1462 = vxor.u32 %v1461, 2147483648
    %v1463 = vmul.f32 %v1462, 1.442695
    %v1464 = vpow.pop %v1463
    %v1465 = vadd.f32 %v1464, 1.0
    %v1466 = vrcp.pop %v1465
    %v1467 = vmul.f32 1.0, %v1466
    %v1468 = vtanh.pop %v1461
    %v1470 = vrot.slane %v1375, 6
    %v1472 = vmul.f32 %v1467, %v1470
    %1474 = vrot.lane.b32.xlu0 %v1468, 64
    %v1475 = vpop.permute.xlu0 %1474
    %v1477 = vmul.f32 %v1467, %v1475
    %1479 = vrot.lane.b32.xlu0 %v1477, 32
    %v1480 = vpop.permute.xlu0 %1479
    %v1482 = vadd.f32 %v1472, %v1480
    %v1483 = vtanh.pop %v1482
    %1485 = vrot.lane.b32.xlu0 %v1483, 64
    %v1486 = vpop.permute.xlu0 %1485
    %v1488 = vmul.f32 %v1467, %v1486
    %v1490 = vrot.slane %v1488, 4
    %1491 = vrot.lane.b32.xlu0 %v1490, 32
    %v1492 = vpop.permute.xlu0 %1491
    %v1493 = vsel %vm232, %v1492, 0
    %1495 = vmatprep.subr.mxu0 0.0
    %1496 = vmatpush1.msra.mxu0 %v1177
    %1497 = vmatprep.subr.mxu0 0.0
    %1498 = vmatpush1.msra.mxu0 %v1178
    %1499 = vmatprep.subr.mxu0 0.0
    %1500 = vmatpush1.msra.mxu0 %v1179
    %1501 = vmatprep.subr.mxu0 0.0
    %1502 = vmatpush1.msra.mxu0 %v1180
    %1503 = vmatprep.subr.mxu0 0.0
    %1504 = vmatpush1.msra.mxu0 0.0
    %1505 = vmatprep.subr.mxu0 0.0
    %1506 = vmatpush1.msra.mxu0 0.0
    %1507 = vmatprep.subr.mxu0 0.0
    %1508 = vmatpush1.msra.mxu0 0.0
    %1509 = vmatprep.subr.mxu0 0.0
    %1510 = vmatpush1.msra.mxu0 0.0
    %1511 = vmatprep.subr.mxu0 0.0
    %1512 = vmatpush1.msra.mxu0 0.0
    %1513 = vmatprep.subr.mxu0 0.0
    %1514 = vmatpush1.msra.mxu0 0.0
    %1515 = vmatprep.subr.mxu0 0.0
    %1516 = vmatpush1.msra.mxu0 0.0
    %1517 = vmatprep.subr.mxu0 0.0
    %1518 = vmatpush1.msra.mxu0 0.0
    %1519 = vmatprep.subr.mxu0 0.0
    %1520 = vmatpush1.msra.mxu0 0.0
    %1521 = vmatprep.subr.mxu0 0.0
    %1522 = vmatpush1.msra.mxu0 0.0
    %1523 = vmatprep.subr.mxu0 0.0
    %1524 = vmatpush1.msra.mxu0 0.0
    %1525 = vmatprep.subr.mxu0 0.0
    %1526 = vmatpush1.msra.mxu0 0.0
    %1527 = vmatprep.subr.mxu0 0.0
    %1528 = vmatpush1.msra.mxu0 0.0
    %1529 = vmatprep.subr.mxu0 0.0
    %1530 = vmatpush1.msra.mxu0 0.0
    %1531 = vmatprep.subr.mxu0 0.0
    %1532 = vmatpush1.msra.mxu0 0.0
    %1533 = vmatprep.subr.mxu0 0.0
    %1534 = vmatpush1.msra.mxu0 0.0
    %1535 = vmatprep.subr.mxu0 0.0
    %1536 = vmatpush1.msra.mxu0 0.0
    %1537 = vmatprep.subr.mxu0 0.0
    %1538 = vmatpush1.msra.mxu0 0.0
    %1539 = vmatprep.subr.mxu0 0.0
    %1540 = vmatpush1.msra.mxu0 0.0
    %1541 = vmatprep.subr.mxu0 0.0
    %1542 = vmatpush1.msra.mxu0 0.0
    %1543 = vmatprep.subr.mxu0 0.0
    %1544 = vmatpush1.msra.mxu0 0.0
    %1545 = vmatprep.subr.mxu0 0.0
    %1546 = vmatpush1.msra.mxu0 0.0
    %1547 = vmatprep.subr.mxu0 0.0
    %1548 = vmatpush1.msra.mxu0 0.0
    %1549 = vmatprep.subr.mxu0 0.0
    %1550 = vmatpush1.msra.mxu0 0.0
    %1551 = vmatprep.subr.mxu0 0.0
    %1552 = vmatpush1.msra.mxu0 0.0
    %1553 = vmatprep.subr.mxu0 0.0
    %1554 = vmatpush1.msra.mxu0 0.0
    %1555 = vmatprep.subr.mxu0 0.0
    %1556 = vmatpush1.msra.mxu0 0.0
    %1557 = vmatprep.subr.mxu0 0.0
    %1558 = vmatpush1.msra.mxu0 0.0
    %1559 = vmatprep.mubr.f32.mxu0 0.0
    %1560 = vmatmul.mubr.f32.gmra.mrb[0].mxu0 %v1493
    %v1561 = vpop.f32.mrb[0].mxu0
    %v1562 = vadd.f32 0.0, %v1561
    %v1563 = vpop.f32.mrb[0].mxu0
    %1564 = vdwg.mxu0
    %v1566 = vrot.slane %v1562, 2
    %v1568 = vadd.f32 %v1169, %v1566
    %v1569 = vxor.u32 %v1568, 2147483648
    %v1570 = vmul.f32 %v1569, 1.442695
    %v1571 = vpow.pop %v1570
    %v1572 = vadd.f32 %v1571, 1.0
    %v1573 = vrcp.pop %v1572
    %v1574 = vmul.f32 1.0, %v1573
    %v1575 = vtanh.pop %v1568
    %v1577 = vrot.slane %v1482, 6
    %v1579 = vmul.f32 %v1574, %v1577
    %1581 = vrot.lane.b32.xlu0 %v1575, 64
    %v1582 = vpop.permute.xlu0 %1581
    %v1584 = vmul.f32 %v1574, %v1582
    %1586 = vrot.lane.b32.xlu0 %v1584, 32
    %v1587 = vpop.permute.xlu0 %1586
    %v1589 = vadd.f32 %v1579, %v1587
    %v1590 = vtanh.pop %v1589
    %1592 = vrot.lane.b32.xlu0 %v1590, 64
    %v1593 = vpop.permute.xlu0 %1592
    %v1595 = vmul.f32 %v1574, %v1593
    %v1597 = vrot.slane %v1595, 6
    %1598 = vrot.lane.b32.xlu0 %v1597, 32
    %v1599 = vpop.permute.xlu0 %1598
    %v1600 = vsel %vm232, %v1599, 0
    %1602 = vmatprep.subr.mxu0 0.0
    %1603 = vmatpush1.msra.mxu0 %v1177
    %1604 = vmatprep.subr.mxu0 0.0
    %1605 = vmatpush1.msra.mxu0 %v1178
    %1606 = vmatprep.subr.mxu0 0.0
    %1607 = vmatpush1.msra.mxu0 %v1179
    %1608 = vmatprep.subr.mxu0 0.0
    %1609 = vmatpush1.msra.mxu0 %v1180
    %1610 = vmatprep.subr.mxu0 0.0
    %1611 = vmatpush1.msra.mxu0 0.0
    %1612 = vmatprep.subr.mxu0 0.0
    %1613 = vmatpush1.msra.mxu0 0.0
    %1614 = vmatprep.subr.mxu0 0.0
    %1615 = vmatpush1.msra.mxu0 0.0
    %1616 = vmatprep.subr.mxu0 0.0
    %1617 = vmatpush1.msra.mxu0 0.0
    %1618 = vmatprep.subr.mxu0 0.0
    %1619 = vmatpush1.msra.mxu0 0.0
    %1620 = vmatprep.subr.mxu0 0.0
    %1621 = vmatpush1.msra.mxu0 0.0
    %1622 = vmatprep.subr.mxu0 0.0
    %1623 = vmatpush1.msra.mxu0 0.0
    %1624 = vmatprep.subr.mxu0 0.0
    %1625 = vmatpush1.msra.mxu0 0.0
    %1626 = vmatprep.subr.mxu0 0.0
    %1627 = vmatpush1.msra.mxu0 0.0
    %1628 = vmatprep.subr.mxu0 0.0
    %1629 = vmatpush1.msra.mxu0 0.0
    %1630 = vmatprep.subr.mxu0 0.0
    %1631 = vmatpush1.msra.mxu0 0.0
    %1632 = vmatprep.subr.mxu0 0.0
    %1633 = vmatpush1.msra.mxu0 0.0
    %1634 = vmatprep.subr.mxu0 0.0
    %1635 = vmatpush1.msra.mxu0 0.0
    %1636 = vmatprep.subr.mxu0 0.0
    %1637 = vmatpush1.msra.mxu0 0.0
    %1638 = vmatprep.subr.mxu0 0.0
    %1639 = vmatpush1.msra.mxu0 0.0
    %1640 = vmatprep.subr.mxu0 0.0
    %1641 = vmatpush1.msra.mxu0 0.0
    %1642 = vmatprep.subr.mxu0 0.0
    %1643 = vmatpush1.msra.mxu0 0.0
    %1644 = vmatprep.subr.mxu0 0.0
    %1645 = vmatpush1.msra.mxu0 0.0
    %1646 = vmatprep.subr.mxu0 0.0
    %1647 = vmatpush1.msra.mxu0 0.0
    %1648 = vmatprep.subr.mxu0 0.0
    %1649 = vmatpush1.msra.mxu0 0.0
    %1650 = vmatprep.subr.mxu0 0.0
    %1651 = vmatpush1.msra.mxu0 0.0
    %1652 = vmatprep.subr.mxu0 0.0
    %1653 = vmatpush1.msra.mxu0 0.0
    %1654 = vmatprep.subr.mxu0 0.0
    %1655 = vmatpush1.msra.mxu0 0.0
    %1656 = vmatprep.subr.mxu0 0.0
    %1657 = vmatpush1.msra.mxu0 0.0
    %1658 = vmatprep.subr.mxu0 0.0
    %1659 = vmatpush1.msra.mxu0 0.0
    %1660 = vmatprep.subr.mxu0 0.0
    %1661 = vmatpush1.msra.mxu0 0.0
    %1662 = vmatprep.subr.mxu0 0.0
    %1663 = vmatpush1.msra.mxu0 0.0
    %1664 = vmatprep.subr.mxu0 0.0
    %1665 = vmatpush1.msra.mxu0 0.0
    %1666 = vmatprep.mubr.f32.mxu0 0.0
    %1667 = vmatmul.mubr.f32.gmra.mrb[0].mxu0 %v1600
    %v1668 = vpop.f32.mrb[0].mxu0
    %v1669 = vadd.f32 0.0, %v1668
    %v1670 = vpop.f32.mrb[0].mxu0
    %1671 = vdwg.mxu0
    %v1672 = vadd.f32 %v1174, %v1669
    %v1673 = vxor.u32 %v1672, 2147483648
    %v1674 = vmul.f32 %v1673, 1.442695
    %v1675 = vpow.pop %v1674
    %v1676 = vadd.f32 %v1675, 1.0
    %v1677 = vrcp.pop %v1676
    %v1678 = vmul.f32 1.0, %v1677
    %v1679 = vtanh.pop %v1672
    %v1681 = vrot.slane %v1589, 6
    %v1683 = vmul.f32 %v1678, %v1681
    %1685 = vrot.lane.b32.xlu0 %v1679, 64
    %v1686 = vpop.permute.xlu0 %1685
    %v1688 = vmul.f32 %v1678, %v1686
    %1690 = vrot.lane.b32.xlu0 %v1688, 32
    %v1691 = vpop.permute.xlu0 %1690
    %v1693 = vadd.f32 %v1683, %v1691
    %v1694 = vtanh.pop %v1693
    %1696 = vrot.lane.b32.xlu0 %v1694, 64
    %v1697 = vpop.permute.xlu0 %1696
    %v1699 = vmul.f32 %v1678, %v1697
    %1701 = vrot.lane.b32.xlu0 %v1699, 32
    %v1702 = vpop.permute.xlu0 %1701
    %v1703 = vsel %vm232, %v1702, 0
    %1705 = vmatprep.subr.mxu0 0.0
    %1706 = vmatpush1.msra.mxu0 %v1177
    %1707 = vmatprep.subr.mxu0 0.0
    %1708 = vmatpush1.msra.mxu0 %v1178
    %1709 = vmatprep.subr.mxu0 0.0
    %1710 = vmatpush1.msra.mxu0 %v1179
    %1711 = vmatprep.subr.mxu0 0.0
    %1712 = vmatpush1.msra.mxu0 %v1180
    %1713 = vmatprep.subr.mxu0 0.0
    %1714 = vmatpush1.msra.mxu0 0.0
    %1715 = vmatprep.subr.mxu0 0.0
    %1716 = vmatpush1.msra.mxu0 0.0
    %1717 = vmatprep.subr.mxu0 0.0
    %1718 = vmatpush1.msra.mxu0 0.0
    %1719 = vmatprep.subr.mxu0 0.0
    %1720 = vmatpush1.msra.mxu0 0.0
    %1721 = vmatprep.subr.mxu0 0.0
    %1722 = vmatpush1.msra.mxu0 0.0
    %1723 = vmatprep.subr.mxu0 0.0
    %1724 = vmatpush1.msra.mxu0 0.0
    %1725 = vmatprep.subr.mxu0 0.0
    %1726 = vmatpush1.msra.mxu0 0.0
    %1727 = vmatprep.subr.mxu0 0.0
    %1728 = vmatpush1.msra.mxu0 0.0
    %1729 = vmatprep.subr.mxu0 0.0
    %1730 = vmatpush1.msra.mxu0 0.0
    %1731 = vmatprep.subr.mxu0 0.0
    %1732 = vmatpush1.msra.mxu0 0.0
    %1733 = vmatprep.subr.mxu0 0.0
    %1734 = vmatpush1.msra.mxu0 0.0
    %1735 = vmatprep.subr.mxu0 0.0
    %1736 = vmatpush1.msra.mxu0 0.0
    %1737 = vmatprep.subr.mxu0 0.0
    %1738 = vmatpush1.msra.mxu0 0.0
    %1739 = vmatprep.subr.mxu0 0.0
    %1740 = vmatpush1.msra.mxu0 0.0
    %1741 = vmatprep.subr.mxu0 0.0
    %1742 = vmatpush1.msra.mxu0 0.0
    %1743 = vmatprep.subr.mxu0 0.0
    %1744 = vmatpush1.msra.mxu0 0.0
    %1745 = vmatprep.subr.mxu0 0.0
    %1746 = vmatpush1.msra.mxu0 0.0
    %1747 = vmatprep.subr.mxu0 0.0
    %1748 = vmatpush1.msra.mxu0 0.0
    %1749 = vmatprep.subr.mxu0 0.0
    %1750 = vmatpush1.msra.mxu0 0.0
    %1751 = vmatprep.subr.mxu0 0.0
    %1752 = vmatpush1.msra.mxu0 0.0
    %1753 = vmatprep.subr.mxu0 0.0
    %1754 = vmatpush1.msra.mxu0 0.0
    %1755 = vmatprep.subr.mxu0 0.0
    %1756 = vmatpush1.msra.mxu0 0.0
    %1757 = vmatprep.subr.mxu0 0.0
    %1758 = vmatpush1.msra.mxu0 0.0
    %1759 = vmatprep.subr.mxu0 0.0
    %1760 = vmatpush1.msra.mxu0 0.0
    %1761 = vmatprep.subr.mxu0 0.0
    %1762 = vmatpush1.msra.mxu0 0.0
    %1763 = vmatprep.subr.mxu0 0.0
    %1764 = vmatpush1.msra.mxu0 0.0
    %1765 = vmatprep.subr.mxu0 0.0
    %1766 = vmatpush1.msra.mxu0 0.0
    %1767 = vmatprep.subr.mxu0 0.0
    %1768 = vmatpush1.msra.mxu0 0.0
    %1769 = vmatprep.mubr.f32.mxu0 0.0
    %1770 = vmatmul.mubr.f32.gmra.mrb[0].mxu0 %v1703
    %v1771 = vpop.f32.mrb[0].mxu0
    %v1772 = vadd.f32 0.0, %v1771
    %v1773 = vpop.f32.mrb[0].mxu0
    %1774 = vdwg.mxu0
    %v1776 = vrot.slane %v1772, 6
    %v1778 = vadd.f32 %v1174, %v1776
    %v1779 = vxor.u32 %v1778, 2147483648
    %v1780 = vmul.f32 %v1779, 1.442695
    %v1781 = vpow.pop %v1780
    %v1782 = vadd.f32 %v1781, 1.0
    %v1783 = vrcp.pop %v1782
    %v1784 = vmul.f32 1.0, %v1783
    %v1785 = vtanh.pop %v1778
    %v1787 = vrot.slane %v1693, 6
    %v1789 = vmul.f32 %v1784, %v1787
    %1791 = vrot.lane.b32.xlu0 %v1785, 64
    %v1792 = vpop.permute.xlu0 %1791
    %v1794 = vmul.f32 %v1784, %v1792
    %1796 = vrot.lane.b32.xlu0 %v1794, 32
    %v1797 = vpop.permute.xlu0 %1796
    %v1799 = vadd.f32 %v1789, %v1797
    %v1800 = vtanh.pop %v1799
    %1802 = vrot.lane.b32.xlu0 %v1800, 64
    %v1803 = vpop.permute.xlu0 %1802
    %v1805 = vmul.f32 %v1784, %v1803
    %v1807 = vrot.slane %v1805, 2
    %1808 = vrot.lane.b32.xlu0 %v1807, 32
    %v1809 = vpop.permute.xlu0 %1808
    %v1810 = vsel %vm232, %v1809, 0
    %1812 = vmatprep.subr.mxu0 0.0
    %1813 = vmatpush1.msra.mxu0 %v1177
    %1814 = vmatprep.subr.mxu0 0.0
    %1815 = vmatpush1.msra.mxu0 %v1178
    %1816 = vmatprep.subr.mxu0 0.0
    %1817 = vmatpush1.msra.mxu0 %v1179
    %1818 = vmatprep.subr.mxu0 0.0
    %1819 = vmatpush1.msra.mxu0 %v1180
    %1820 = vmatprep.subr.mxu0 0.0
    %1821 = vmatpush1.msra.mxu0 0.0
    %1822 = vmatprep.subr.mxu0 0.0
    %1823 = vmatpush1.msra.mxu0 0.0
    %1824 = vmatprep.subr.mxu0 0.0
    %1825 = vmatpush1.msra.mxu0 0.0
    %1826 = vmatprep.subr.mxu0 0.0
    %1827 = vmatpush1.msra.mxu0 0.0
    %1828 = vmatprep.subr.mxu0 0.0
    %1829 = vmatpush1.msra.mxu0 0.0
    %1830 = vmatprep.subr.mxu0 0.0
    %1831 = vmatpush1.msra.mxu0 0.0
    %1832 = vmatprep.subr.mxu0 0.0
    %1833 = vmatpush1.msra.mxu0 0.0
    %1834 = vmatprep.subr.mxu0 0.0
    %1835 = vmatpush1.msra.mxu0 0.0
    %1836 = vmatprep.subr.mxu0 0.0
    %1837 = vmatpush1.msra.mxu0 0.0
    %1838 = vmatprep.subr.mxu0 0.0
    %1839 = vmatpush1.msra.mxu0 0.0
    %1840 = vmatprep.subr.mxu0 0.0
    %1841 = vmatpush1.msra.mxu0 0.0
    %1842 = vmatprep.subr.mxu0 0.0
    %1843 = vmatpush1.msra.mxu0 0.0
    %1844 = vmatprep.subr.mxu0 0.0
    %1845 = vmatpush1.msra.mxu0 0.0
    %1846 = vmatprep.subr.mxu0 0.0
    %1847 = vmatpush1.msra.mxu0 0.0
    %1848 = vmatprep.subr.mxu0 0.0
    %1849 = vmatpush1.msra.mxu0 0.0
    %1850 = vmatprep.subr.mxu0 0.0
    %1851 = vmatpush1.msra.mxu0 0.0
    %1852 = vmatprep.subr.mxu0 0.0
    %1853 = vmatpush1.msra.mxu0 0.0
    %1854 = vmatprep.subr.mxu0 0.0
    %1855 = vmatpush1.msra.mxu0 0.0
    %1856 = vmatprep.subr.mxu0 0.0
    %1857 = vmatpush1.msra.mxu0 0.0
    %1858 = vmatprep.subr.mxu0 0.0
    %1859 = vmatpush1.msra.mxu0 0.0
    %1860 = vmatprep.subr.mxu0 0.0
    %1861 = vmatpush1.msra.mxu0 0.0
    %1862 = vmatprep.subr.mxu0 0.0
    %1863 = vmatpush1.msra.mxu0 0.0
    %1864 = vmatprep.subr.mxu0 0.0
    %1865 = vmatpush1.msra.mxu0 0.0
    %1866 = vmatprep.subr.mxu0 0.0
    %1867 = vmatpush1.msra.mxu0 0.0
    %1868 = vmatprep.subr.mxu0 0.0
    %1869 = vmatpush1.msra.mxu0 0.0
    %1870 = vmatprep.subr.mxu0 0.0
    %1871 = vmatpush1.msra.mxu0 0.0
    %1872 = vmatprep.subr.mxu0 0.0
    %1873 = vmatpush1.msra.mxu0 0.0
    %1874 = vmatprep.subr.mxu0 0.0
    %1875 = vmatpush1.msra.mxu0 0.0
    %1876 = vmatprep.mubr.f32.mxu0 0.0
    %1877 = vmatmul.mubr.f32.gmra.mrb[0].mxu0 %v1810
    %v1878 = vpop.f32.mrb[0].mxu0
    %v1879 = vadd.f32 0.0, %v1878
    %v1880 = vpop.f32.mrb[0].mxu0
    %1881 = vdwg.mxu0
    %v1883 = vrot.slane %v1879, 4
    %v1885 = vadd.f32 %v1174, %v1883
    %v1886 = vxor.u32 %v1885, 2147483648
    %v1887 = vmul.f32 %v1886, 1.442695
    %v1888 = vpow.pop %v1887
    %v1889 = vadd.f32 %v1888, 1.0
    %v1890 = vrcp.pop %v1889
    %v1891 = vmul.f32 1.0, %v1890
    %v1892 = vtanh.pop %v1885
    %v1894 = vrot.slane %v1799, 6
    %v1896 = vmul.f32 %v1891, %v1894
    %1898 = vrot.lane.b32.xlu0 %v1892, 64
    %v1899 = vpop.permute.xlu0 %1898
    %v1901 = vmul.f32 %v1891, %v1899
    %1903 = vrot.lane.b32.xlu0 %v1901, 32
    %v1904 = vpop.permute.xlu0 %1903
    %v1906 = vadd.f32 %v1896, %v1904
    %v1907 = vtanh.pop %v1906
    %1909 = vrot.lane.b32.xlu0 %v1907, 64
    %v1910 = vpop.permute.xlu0 %1909
    %v1912 = vmul.f32 %v1891, %v1910
    %v1914 = vrot.slane %v1912, 4
    %1915 = vrot.lane.b32.xlu0 %v1914, 32
    %v1916 = vpop.permute.xlu0 %1915
    %v1917 = vsel %vm232, %v1916, 0
    %1919 = vmatprep.subr.mxu0 0.0
    %1920 = vmatpush1.msra.mxu0 %v1177
    %1921 = vmatprep.subr.mxu0 0.0
    %1922 = vmatpush1.msra.mxu0 %v1178
    %1923 = vmatprep.subr.mxu0 0.0
    %1924 = vmatpush1.msra.mxu0 %v1179
    %1925 = vmatprep.subr.mxu0 0.0
    %1926 = vmatpush1.msra.mxu0 %v1180
    %1927 = vmatprep.subr.mxu0 0.0
    %1928 = vmatpush1.msra.mxu0 0.0
    %1929 = vmatprep.subr.mxu0 0.0
    %1930 = vmatpush1.msra.mxu0 0.0
    %1931 = vmatprep.subr.mxu0 0.0
    %1932 = vmatpush1.msra.mxu0 0.0
    %1933 = vmatprep.subr.mxu0 0.0
    %1934 = vmatpush1.msra.mxu0 0.0
    %1935 = vmatprep.subr.mxu0 0.0
    %1936 = vmatpush1.msra.mxu0 0.0
    %1937 = vmatprep.subr.mxu0 0.0
    %1938 = vmatpush1.msra.mxu0 0.0
    %1939 = vmatprep.subr.mxu0 0.0
    %1940 = vmatpush1.msra.mxu0 0.0
    %1941 = vmatprep.subr.mxu0 0.0
    %1942 = vmatpush1.msra.mxu0 0.0
    %1943 = vmatprep.subr.mxu0 0.0
    %1944 = vmatpush1.msra.mxu0 0.0
    %1945 = vmatprep.subr.mxu0 0.0
    %1946 = vmatpush1.msra.mxu0 0.0
    %1947 = vmatprep.subr.mxu0 0.0
    %1948 = vmatpush1.msra.mxu0 0.0
    %1949 = vmatprep.subr.mxu0 0.0
    %1950 = vmatpush1.msra.mxu0 0.0
    %1951 = vmatprep.subr.mxu0 0.0
    %1952 = vmatpush1.msra.mxu0 0.0
    %1953 = vmatprep.subr.mxu0 0.0
    %1954 = vmatpush1.msra.mxu0 0.0
    %1955 = vmatprep.subr.mxu0 0.0
    %1956 = vmatpush1.msra.mxu0 0.0
    %1957 = vmatprep.subr.mxu0 0.0
    %1958 = vmatpush1.msra.mxu0 0.0
    %1959 = vmatprep.subr.mxu0 0.0
    %1960 = vmatpush1.msra.mxu0 0.0
    %1961 = vmatprep.subr.mxu0 0.0
    %1962 = vmatpush1.msra.mxu0 0.0
    %1963 = vmatprep.subr.mxu0 0.0
    %1964 = vmatpush1.msra.mxu0 0.0
    %1965 = vmatprep.subr.mxu0 0.0
    %1966 = vmatpush1.msra.mxu0 0.0
    %1967 = vmatprep.subr.mxu0 0.0
    %1968 = vmatpush1.msra.mxu0 0.0
    %1969 = vmatprep.subr.mxu0 0.0
    %1970 = vmatpush1.msra.mxu0 0.0
    %1971 = vmatprep.subr.mxu0 0.0
    %1972 = vmatpush1.msra.mxu0 0.0
    %1973 = vmatprep.subr.mxu0 0.0
    %1974 = vmatpush1.msra.mxu0 0.0
    %1975 = vmatprep.subr.mxu0 0.0
    %1976 = vmatpush1.msra.mxu0 0.0
    %1977 = vmatprep.subr.mxu0 0.0
    %1978 = vmatpush1.msra.mxu0 0.0
    %1979 = vmatprep.subr.mxu0 0.0
    %1980 = vmatpush1.msra.mxu0 0.0
    %1981 = vmatprep.subr.mxu0 0.0
    %1982 = vmatpush1.msra.mxu0 0.0
    %1983 = vmatprep.mubr.f32.mxu0 0.0
    %1984 = vmatmul.mubr.f32.gmra.mrb[0].mxu0 %v1917
    %v1985 = vpop.f32.mrb[0].mxu0
    %v1986 = vadd.f32 0.0, %v1985
    %v1987 = vpop.f32.mrb[0].mxu0
    %1988 = vdwg.mxu0
    %v1990 = vrot.slane %v1986, 2
    %v1992 = vadd.f32 %v1174, %v1990
    %v1993 = vxor.u32 %v1992, 2147483648
    %v1994 = vmul.f32 %v1993, 1.442695
    %v1995 = vpow.pop %v1994
    %v1996 = vadd.f32 %v1995, 1.0
    %v1997 = vrcp.pop %v1996
    %v1998 = vmul.f32 1.0, %v1997
    %v1999 = vtanh.pop %v1992
    %v2001 = vrot.slane %v1906, 6
    %v2003 = vmul.f32 %v1998, %v2001
    %2005 = vrot.lane.b32.xlu0 %v1999, 64
    %v2006 = vpop.permute.xlu0 %2005
    %v2008 = vmul.f32 %v1998, %v2006
    %2010 = vrot.lane.b32.xlu0 %v2008, 32
    %v2011 = vpop.permute.xlu0 %2010
    %v2013 = vadd.f32 %v2003, %v2011
    %v2014 = vtanh.pop %v2013
    %2016 = vrot.lane.b32.xlu0 %v2014, 64
    %v2017 = vpop.permute.xlu0 %2016
    %v2019 = vmul.f32 %v1998, %v2017
    %v2020 = vld [vmem:[%s7] sm:$0xff]
    %v2021 = vld [vmem:[%s7 + $0x8] sm:$0xff]
    %v2022 = vld [vmem:[%s7 + $0x10] sm:$0xff]
    %v2023 = vld [vmem:[%s7 + $0x18] sm:$0xff]
    %v2024 = vld [vmem:[#allocation2] sm:$0x1]
    %v2026 = vlaneseq
    %v2027 = vshrl.u32 %v2026, 7
    %v2028 = vsub.s32 0, %v2027
    %v2029 = vrot.slane %v2024, %v2028
    %v2032 = vrot.slane %v2019, 6
    %2033 = vrot.lane.b32.xlu0 %v2032, 32
    %v2034 = vpop.permute.xlu0 %2033
    %v2035 = vsel %vm232, %v2034, 0
    %2037 = vmatprep.subr.mxu0 0.0
    %2038 = vmatpush1.msra.mxu0 %v2020
    %2039 = vmatprep.subr.mxu0 0.0
    %2040 = vmatpush1.msra.mxu0 %v2021
    %2041 = vmatprep.subr.mxu0 0.0
    %2042 = vmatpush1.msra.mxu0 %v2022
    %2043 = vmatprep.subr.mxu0 0.0
    %2044 = vmatpush1.msra.mxu0 %v2023
    %2045 = vmatprep.subr.mxu0 0.0
    %2046 = vmatpush1.msra.mxu0 0.0
    %2047 = vmatprep.subr.mxu0 0.0
    %2048 = vmatpush1.msra.mxu0 0.0
    %2049 = vmatprep.subr.mxu0 0.0
    %2050 = vmatpush1.msra.mxu0 0.0
    %2051 = vmatprep.subr.mxu0 0.0
    %2052 = vmatpush1.msra.mxu0 0.0
    %2053 = vmatprep.subr.mxu0 0.0
    %2054 = vmatpush1.msra.mxu0 0.0
    %2055 = vmatprep.subr.mxu0 0.0
    %2056 = vmatpush1.msra.mxu0 0.0
    %2057 = vmatprep.subr.mxu0 0.0
    %2058 = vmatpush1.msra.mxu0 0.0
    %2059 = vmatprep.subr.mxu0 0.0
    %2060 = vmatpush1.msra.mxu0 0.0
    %2061 = vmatprep.subr.mxu0 0.0
    %2062 = vmatpush1.msra.mxu0 0.0
    %2063 = vmatprep.subr.mxu0 0.0
    %2064 = vmatpush1.msra.mxu0 0.0
    %2065 = vmatprep.subr.mxu0 0.0
    %2066 = vmatpush1.msra.mxu0 0.0
    %2067 = vmatprep.subr.mxu0 0.0
    %2068 = vmatpush1.msra.mxu0 0.0
    %2069 = vmatprep.subr.mxu0 0.0
    %2070 = vmatpush1.msra.mxu0 0.0
    %2071 = vmatprep.subr.mxu0 0.0
    %2072 = vmatpush1.msra.mxu0 0.0
    %2073 = vmatprep.subr.mxu0 0.0
    %2074 = vmatpush1.msra.mxu0 0.0
    %2075 = vmatprep.subr.mxu0 0.0
    %2076 = vmatpush1.msra.mxu0 0.0
    %2077 = vmatprep.subr.mxu0 0.0
    %2078 = vmatpush1.msra.mxu0 0.0
    %2079 = vmatprep.subr.mxu0 0.0
    %2080 = vmatpush1.msra.mxu0 0.0
    %2081 = vmatprep.subr.mxu0 0.0
    %2082 = vmatpush1.msra.mxu0 0.0
    %2083 = vmatprep.subr.mxu0 0.0
    %2084 = vmatpush1.msra.mxu0 0.0
    %2085 = vmatprep.subr.mxu0 0.0
    %2086 = vmatpush1.msra.mxu0 0.0
    %2087 = vmatprep.subr.mxu0 0.0
    %2088 = vmatpush1.msra.mxu0 0.0
    %2089 = vmatprep.subr.mxu0 0.0
    %2090 = vmatpush1.msra.mxu0 0.0
    %2091 = vmatprep.subr.mxu0 0.0
    %2092 = vmatpush1.msra.mxu0 0.0
    %2093 = vmatprep.subr.mxu0 0.0
    %2094 = vmatpush1.msra.mxu0 0.0
    %2095 = vmatprep.subr.mxu0 0.0
    %2096 = vmatpush1.msra.mxu0 0.0
    %2097 = vmatprep.subr.mxu0 0.0
    %2098 = vmatpush1.msra.mxu0 0.0
    %2099 = vmatprep.subr.mxu0 0.0
    %2100 = vmatpush1.msra.mxu0 0.0
    %2101 = vmatprep.mubr.f32.mxu0 0.0
    %2102 = vmatmul.mubr.f32.gmra.mrb[0].mxu0 %v2035
    %v2103 = vpop.f32.mrb[0].mxu0
    %v2104 = vadd.f32 %v2029, %v2103
    %v2105 = vpop.f32.mrb[0].mxu0
    %2106 = vdwg.mxu0
    %vm2107 = vcmask 1024
    %2108 = vst.msk [vmem:[%s9] sm:$0x3] %vm2107, %v2104
    // Predicated region
    $region46: #{lstm_forecaster_forward.1} parent=1 // pred_check
      _
    $region47: #{lstm_forecaster_forward.1} parent=1 // pred_check_branch
      %2110 = sbr.rel (0) target = $region49
    $region48: #{lstm_forecaster_forward.1} parent=1 // pred_region
      _
    $region49: #{lstm_forecaster_forward.1} parent=1 // pred_fallthru
      _
    // Predicated region
    $region50: #{lstm_forecaster_forward.1} parent=1 // pred_check
      _
    $region51: #{lstm_forecaster_forward.1} parent=1 // pred_check_branch
      %2112 = sbr.rel (0) target = $region53
    $region52: #{lstm_forecaster_forward.1} parent=1 // pred_region
      _
    $region53: #{lstm_forecaster_forward.1} parent=1 // pred_fallthru
      _
    %2113 = vsyncpa [#allocation4], 1
    %2114 = vsyncpa [#allocation6], 1

</llo_original>
